<compile_context>
chip_gen: v7x
topology: tpu7x:2x2x1
jax: 0.10.0
libtpu: 0.0.40
codegen_flags: <defaults>
</compile_context>

<pallas_src>
import math

import jax
import jax.numpy as jnp
import numpy as np
from jax import lax
from jax.experimental import pallas as pl
from jax.experimental.pallas import tpu as pltpu

# ----------------------------- config (small) -----------------------------
BATCH = 2
SEQ = 8
HIDDEN = 64
NUM_HEADS = 4
NUM_KV_HEADS = 2
HEAD_DIM = HIDDEN // NUM_HEADS          # 16
D_ROT = HEAD_DIM // 2                   # 8  (only first half of head_dim is rotated)
INTERMEDIATE = 128
RMS_EPS = 1e-5
ROPE_BASE = 500000.0
NEG_BIG = -1e9                          # finite mask bias (exp(-1e9) == 0, no NaN risk)


# ------------------------------ Pallas kernel ------------------------------
def decoder_layer_kernel(x_ref, cos_ref, sin_ref, bias_ref, ln1_ref, ln2_ref,
                         wqkv_ref, wqkvr_ref, rowmask_ref, gsum_ref,
                         wo_ref, wgu_ref, wd_ref, o_ref):
    """One batch element (S tokens) per grid step.

    x_ref     : (S, D)          this batch's activations
    cos/sin   : (S, 2*H*hd)     RoPE tables for the Q|K lanes only (1/0 on non-rotated lanes)
    bias_ref  : (S, H*S)        additive causal mask, tiled per head
    ln*_ref   : (1, D)          RMSNorm weights
    wqkv_ref  : (D, 3*H*hd)     fused q | k_exp | v_exp (scale + GQA folded in)
    wqkvr_ref : (D, 2*H*hd)     rotate-half companion for the Q|K columns
    rowmask   : (H*S, H*hd)     block-diagonal head mask
    gsum_ref  : (H*S, H*S)      block-ones (per-head softmax denominator via MXU)
    wo_ref    : (D, D)   wgu_ref : (D, 2*I)   wd_ref : (I, D)
    o_ref     : (S, D)
    """
    f32 = jnp.float32
    QW = NUM_HEADS * HEAD_DIM       # 64  (all query heads packed on lanes)
    QK = 2 * QW                     # 128 (Q|K region of the fused projection)

    x = x_ref[...]

    # ---- RMSNorm 1 (rsqrt -> EUP slot, no VALU divide) ----
    h = x * lax.rsqrt(jnp.mean(x * x, axis=-1, keepdims=True) + RMS_EPS) * ln1_ref[...]

    # ---- fused QKV projection + RoPE (companion matmul restricted to Q|K lanes) ----
    r = jnp.dot(h, wqkv_ref[...], preferred_element_type=f32)       # (S, 3*QW)
    rc = jnp.dot(h, wqkvr_ref[...], preferred_element_type=f32)     # (S, 2*QW) rotate-half
    roped_qk = r[:, :QK] * cos_ref[...] + rc * sin_ref[...]         # (S, 2*QW)

    q = roped_qk[:, :QW]            # (S, QW) scaled + roped queries, heads packed on lanes
    k = roped_qk[:, QW:]            # (S, QW) roped keys, already GQA-expanded per query head
    v = r[:, QK:]                   # (S, QW) values (untouched by RoPE; 128-lane-aligned slice)

    # ---- block-diagonal K/V via sublane tile + mask (VPU only; no tiny MXU matmuls) ----
    kbd = jnp.tile(k, (NUM_HEADS, 1)) * rowmask_ref[...]            # (H*S, QW)
    vbd = jnp.tile(v, (NUM_HEADS, 1)) * rowmask_ref[...]            # (H*S, QW)

    # ---- all heads at once: scores, softmax, weighted values ----
    s = lax.dot_general(q, kbd, (((1,), (1,)), ((), ())),
                        preferred_element_type=f32)                 # (S, H*S) per-head scores
    s = s + bias_ref[...]                                           # causal bias (finite -1e9)
    e = jnp.exp(s)                                                  # masked lanes -> exactly 0
    denom = jnp.dot(e, gsum_ref[...], preferred_element_type=f32)   # per-head sums, broadcast
    p = e * pl.reciprocal(jnp.maximum(denom, 1e-30), approx=False)  # exact reciprocal

    attn = jnp.dot(p, vbd, preferred_element_type=f32)              # (S, QW) heads re-packed
    x1 = x + jnp.dot(attn, wo_ref[...], preferred_element_type=f32)

    # ---- RMSNorm 2 + fused gate|up MLP ----
    h2 = x1 * lax.rsqrt(jnp.mean(x1 * x1, axis=-1, keepdims=True) + RMS_EPS) * ln2_ref[...]
    gu = jnp.dot(h2, wgu_ref[...], preferred_element_type=f32)      # (S, 2*I)
    g = gu[:, :INTERMEDIATE]                                        # 128-lane aligned split
    u = gu[:, INTERMEDIATE:]
    act = g * jax.nn.sigmoid(g) * u                                 # SiLU(gate) * up
    o_ref[...] = x1 + jnp.dot(act, wd_ref[...], preferred_element_type=f32)


# --------------------- one-time weight/constant packing ---------------------
def pack_decoder_params(params, cos, sin, seq_len):
    """Runs ONCE at weight-load time (numpy, host side). Returns device constants."""
    D, H, KV, hd = HIDDEN, NUM_HEADS, NUM_KV_HEADS, HEAD_DIM
    rep = H // KV
    QW = H * hd
    S = seq_len
    d_rot = cos.shape[-1]
    half = d_rot // 2

    wq = np.asarray(params["wq_t"], np.float32) * (1.0 / math.sqrt(hd))   # fold attn scale

    def expand_kv(w):                                # (D, KV*hd) -> (D, H*hd): GQA repeat
        w = np.asarray(w, np.float32)
        return np.repeat(w.reshape(D, KV, hd), rep, axis=1).reshape(D, QW)

    w_qkv = np.concatenate([wq, expand_kv(params["wk_t"]), expand_kv(params["wv_t"])],
                           axis=1)                                        # (D, 3*QW)

    # RoPE rotate-half companion (Q|K columns only), built by direct column permutation.
    w_qk = w_qkv[:, :2 * QW]
    w_qkvr = np.zeros_like(w_qk)                                          # (D, 2*QW)
    for blk in range(2 * H):                         # Q heads then expanded-K heads
        L0 = blk * hd
        w_qkvr[:, L0:L0 + half] = -w_qk[:, L0 + half:L0 + d_rot]
        w_qkvr[:, L0 + half:L0 + d_rot] = w_qk[:, L0:L0 + half]
        # columns [L0 + d_rot, L0 + hd) stay zero (sin is 0 on non-rotated lanes)

    # per-head RoPE tables, tiled across the 2*H Q|K head blocks -> (S, 2*QW)
    cos_np = np.asarray(cos, np.float32)
    sin_np = np.asarray(sin, np.float32)
    head_cos = np.concatenate([cos_np, np.ones((S, hd - d_rot), np.float32)], axis=1)
    head_sin = np.concatenate([sin_np, np.zeros((S, hd - d_rot), np.float32)], axis=1)
    cos_qk = np.tile(head_cos, (1, 2 * H))
    sin_qk = np.tile(head_sin, (1, 2 * H))

    # additive causal mask, tiled across heads (per sequence; grid separates batches)
    pos = np.arange(S)
    causal = pos[None, :] <= pos[:, None]
    bias = np.tile(np.where(causal, 0.0, NEG_BIG).astype(np.float32), (1, H))   # (S, H*S)

    # head-separation constants for the block-diagonal trick
    rowmask = (np.arange(QW)[None, :] // hd ==
               np.arange(H * S)[:, None] // S).astype(np.float32)               # (H*S, QW)
    gsum = (np.arange(H * S)[None, :] // S ==
            np.arange(H * S)[:, None] // S).astype(np.float32)                  # (H*S, H*S)

    w_gu = np.concatenate([np.asarray(params["wg_t"], np.float32),
                           np.asarray(params["wu_t"], np.float32)], axis=1)     # (D, 2*I)

    return {
        "cos_qk": jnp.asarray(cos_qk), "sin_qk": jnp.asarray(sin_qk),
        "bias": jnp.asarray(bias),
        "ln1": jnp.asarray(params["ln1"]), "ln2": jnp.asarray(params["ln2"]),
        "w_qkv": jnp.asarray(w_qkv), "w_qkvr": jnp.asarray(w_qkvr),
        "rowmask": jnp.asarray(rowmask), "gsum": jnp.asarray(gsum),
        "wo": jnp.asarray(params["wo_t"]), "w_gu": jnp.asarray(w_gu),
        "wd": jnp.asarray(params["wd_t"]),
    }


# ------------------------------ forward wrapper ------------------------------
def decoder_layer(x, packed):
    """x: (B, S, D); packed: output of pack_decoder_params (constants, packed once)."""
    B, S, D = x.shape
    H, hd = NUM_HEADS, HEAD_DIM
    QW = H * hd
    BS = B * S
    f32 = jnp.float32

    args = (x.reshape(BS, D), packed["cos_qk"], packed["sin_qk"], packed["bias"],
            packed["ln1"], packed["ln2"], packed["w_qkv"], packed["w_qkvr"],
            packed["rowmask"], packed["gsum"], packed["wo"], packed["w_gu"], packed["wd"])

    def whole(shape):      # grid-invariant full-array block (stays resident across steps)
        return pl.BlockSpec(shape, lambda b, _s=shape: tuple(0 for _ in _s))

    in_specs = [
        pl.BlockSpec((S, D), lambda b: (b, 0)),          # x rows for this batch
        whole((S, 2 * QW)), whole((S, 2 * QW)),          # cos, sin (Q|K lanes)
        whole((S, H * S)),                               # causal bias
        whole((1, D)), whole((1, D)),                    # ln1, ln2
        whole((D, 3 * QW)), whole((D, 2 * QW)),          # wqkv, wqkvr
        whole((H * S, QW)), whole((H * S, H * S)),       # rowmask, gsum
        whole((D, D)), whole((D, 2 * INTERMEDIATE)), whole((INTERMEDIATE, D)),
    ]

    out2d = pl.pallas_call(
        decoder_layer_kernel,
        out_shape=jax.ShapeDtypeStruct((BS, D), f32),
        grid=(B,),                                       # batch axis -> both TCs on v7x
        in_specs=in_specs,
        out_specs=pl.BlockSpec((S, D), lambda b: (b, 0)),
        compiler_params=pltpu.CompilerParams(dimension_semantics=("parallel",)),
    )(*args)
    return out2d.reshape(B, S, D)


# --------------------------- pure-JAX reference ---------------------------
def ref_decoder_layer(x, cos, sin, params):
    B, S, D = x.shape
    hd, d_rot = HEAD_DIM, D_ROT
    rep = NUM_HEADS // NUM_KV_HEADS

    def rms(t, w):
        return t / jnp.sqrt(jnp.mean(t * t, -1, keepdims=True) + RMS_EPS) * w[0]

    h = rms(x, params["ln1"])
    q = h @ params["wq_t"]
    k = h @ params["wk_t"]
    v = h @ params["wv_t"]
    q = q.reshape(B, S, NUM_HEADS, hd)
    k = k.reshape(B, S, NUM_KV_HEADS, hd)
    v = v.reshape(B, S, NUM_KV_HEADS, hd)

    def rope(t):
        xr = t[..., :d_rot]
        x1, x2 = xr[..., :d_rot // 2], xr[..., d_rot // 2:]
        c = cos[None, :, None, :]
        s = sin[None, :, None, :]
        rot = xr * c + jnp.concatenate([-x2, x1], axis=-1) * s
        return jnp.concatenate([rot, t[..., d_rot:]], axis=-1)

    q, k = rope(q), rope(k)
    k = jnp.repeat(k, rep, axis=2)
    v = jnp.repeat(v, rep, axis=2)
    q = q.transpose(0, 2, 1, 3)
    k = k.transpose(0, 2, 1, 3)
    v = v.transpose(0, 2, 1, 3)
    s = jnp.einsum("bhqd,bhkd->bhqk", q, k) / math.sqrt(hd)
    mask = jnp.tril(jnp.ones((S, S), bool))
    s = jnp.where(mask[None, None], s, -jnp.inf)
    p = jax.nn.softmax(s, axis=-1)
    o = jnp.einsum("bhqk,bhkd->bhqd", p, v).transpose(0, 2, 1, 3).reshape(B, S, D)
    x1 = x + o @ params["wo_t"]

    h2 = rms(x1, params["ln2"])
    g = h2 @ params["wg_t"]
    u = h2 @ params["wu_t"]
    return x1 + (jax.nn.silu(g) * u) @ params["wd_t"]


# ------------------------------ main ------------------------------
if __name__ == "__main__":
    key = jax.random.PRNGKey(0)
    ks = jax.random.split(key, 10)

    def w(k, fan_in, fan_out):
        return jax.random.normal(k, (fan_in, fan_out), jnp.float32) * 0.05

    params = {
        "ln1": jnp.ones((1, HIDDEN), jnp.float32),
        "ln2": jnp.ones((1, HIDDEN), jnp.float32),
        "wq_t": w(ks[0], HIDDEN, NUM_HEADS * HEAD_DIM),
        "wk_t": w(ks[1], HIDDEN, NUM_KV_HEADS * HEAD_DIM),
        "wv_t": w(ks[2], HIDDEN, NUM_KV_HEADS * HEAD_DIM),
        "wo_t": w(ks[3], HIDDEN, HIDDEN),
        "wg_t": w(ks[4], HIDDEN, INTERMEDIATE),
        "wu_t": w(ks[5], HIDDEN, INTERMEDIATE),
        "wd_t": w(ks[6], INTERMEDIATE, HIDDEN),
    }

    # rotary tables (first head_dim//2 columns of get_cos_sin), bf16-rounded as in torch
    theta = 1.0 / (ROPE_BASE ** (jnp.arange(0, HEAD_DIM, 2, dtype=jnp.float32) / HEAD_DIM))
    pos = jnp.arange(SEQ, dtype=jnp.float32)[:, None]
    cos = jnp.cos(pos * theta[None, :]).astype(jnp.bfloat16).astype(jnp.float32)  # [S, D_ROT]
    sin = jnp.sin(pos * theta[None, :]).astype(jnp.bfloat16).astype(jnp.float32)

    x = jax.random.normal(ks[7], (BATCH, SEQ, HIDDEN), jnp.float32)

    # pack once at load time (hoisted out of the per-forward path), jit the forward
    packed = pack_decoder_params(params, cos, sin, SEQ)
    fwd = jax.jit(decoder_layer)

    out = jax.block_until_ready(fwd(x, packed))

    ref = ref_decoder_layer(x, cos, sin, params)
    np.testing.assert_allclose(np.asarray(out), np.asarray(ref), rtol=2e-3, atol=2e-3)

    print("KERNEL_OK")
</pallas_src>

<mosaic_0001>
module attributes {stable_mosaic.version = 11 : i64} {
  func.func @decoder_layer_kernel(%arg0: i32, %arg1: memref<8x64xf32, #tpu.memory_space<vmem>>, %arg2: memref<8x128xf32, #tpu.memory_space<vmem>>, %arg3: memref<8x128xf32, #tpu.memory_space<vmem>>, %arg4: memref<8x32xf32, #tpu.memory_space<vmem>>, %arg5: memref<1x64xf32, #tpu.memory_space<vmem>>, %arg6: memref<1x64xf32, #tpu.memory_space<vmem>>, %arg7: memref<64x192xf32, #tpu.memory_space<vmem>>, %arg8: memref<64x128xf32, #tpu.memory_space<vmem>>, %arg9: memref<32x64xf32, #tpu.memory_space<vmem>>, %arg10: memref<32x32xf32, #tpu.memory_space<vmem>>, %arg11: memref<64x64xf32, #tpu.memory_space<vmem>>, %arg12: memref<64x256xf32, #tpu.memory_space<vmem>>, %arg13: memref<128x64xf32, #tpu.memory_space<vmem>>, %arg14: memref<8x64xf32, #tpu.memory_space<vmem>>) attributes {dimension_semantics = [#tpu.dimension_semantics<parallel>], iteration_bounds = array<i64: 2>, scalar_prefetch = 0 : i64, scratch_operands = 0 : i64, tpu.core_type = #tpu.core_type<tc>, window_params = [{transform_indices = @transform_0, window_bounds = array<i64: 8, 64>}, {pipeline_mode = #tpu.pipeline_mode<synchronous>, transform_indices = @transform_1, window_bounds = array<i64: 8, 128>}, {pipeline_mode = #tpu.pipeline_mode<synchronous>, transform_indices = @transform_2, window_bounds = array<i64: 8, 128>}, {pipeline_mode = #tpu.pipeline_mode<synchronous>, transform_indices = @transform_3, window_bounds = array<i64: 8, 32>}, {pipeline_mode = #tpu.pipeline_mode<synchronous>, transform_indices = @transform_4, window_bounds = array<i64: 1, 64>}, {pipeline_mode = #tpu.pipeline_mode<synchronous>, transform_indices = @transform_5, window_bounds = array<i64: 1, 64>}, {pipeline_mode = #tpu.pipeline_mode<synchronous>, transform_indices = @transform_6, window_bounds = array<i64: 64, 192>}, {pipeline_mode = #tpu.pipeline_mode<synchronous>, transform_indices = @transform_7, window_bounds = array<i64: 64, 128>}, {pipeline_mode = #tpu.pipeline_mode<synchronous>, transform_indices = @transform_8, window_bounds = array<i64: 32, 64>}, {pipeline_mode = #tpu.pipeline_mode<synchronous>, transform_indices = @transform_9, window_bounds = array<i64: 32, 32>}, {pipeline_mode = #tpu.pipeline_mode<synchronous>, transform_indices = @transform_10, window_bounds = array<i64: 64, 64>}, {pipeline_mode = #tpu.pipeline_mode<synchronous>, transform_indices = @transform_11, window_bounds = array<i64: 64, 256>}, {pipeline_mode = #tpu.pipeline_mode<synchronous>, transform_indices = @transform_12, window_bounds = array<i64: 128, 64>}, {transform_indices = @transform_13, window_bounds = array<i64: 8, 64>}]} {
    %c0 = arith.constant 0 : index
    %c0_0 = arith.constant 0 : index
    %0 = vector.load %arg1[%c0, %c0_0] : memref<8x64xf32, #tpu.memory_space<vmem>>, vector<8x64xf32>
    %1 = arith.mulf %0, %0 : vector<8x64xf32>
    %cst = arith.constant dense<0.000000e+00> : vector<8xf32>
    %2 = vector.multi_reduction <add>, %1, %cst [1] : vector<8x64xf32> to vector<8xf32>
    %3 = vector.shape_cast %2 : vector<8xf32> to vector<8x1xf32>
    %cst_1 = arith.constant 6.400000e+01 : f32
    %4 = vector.broadcast %cst_1 : f32 to vector<8x1xf32>
    %5 = arith.divf %3, %4 : vector<8x1xf32>
    %cst_2 = arith.constant 9.99999974E-6 : f32
    %6 = vector.broadcast %cst_2 : f32 to vector<8x1xf32>
    %7 = arith.addf %5, %6 : vector<8x1xf32>
    %8 = math.rsqrt %7 : vector<8x1xf32>
    %9 = vector.broadcast %8 : vector<8x1xf32> to vector<8x64xf32>
    %10 = arith.mulf %0, %9 : vector<8x64xf32>
    %c0_3 = arith.constant 0 : index
    %c0_4 = arith.constant 0 : index
    %11 = vector.load %arg5[%c0_3, %c0_4] : memref<1x64xf32, #tpu.memory_space<vmem>>, vector<1x64xf32>
    %12 = vector.broadcast %11 : vector<1x64xf32> to vector<8x64xf32>
    %13 = arith.mulf %10, %12 : vector<8x64xf32>
    %c0_5 = arith.constant 0 : index
    %c0_6 = arith.constant 0 : index
    %14 = vector.load %arg7[%c0_5, %c0_6] : memref<64x192xf32, #tpu.memory_space<vmem>>, vector<64x192xf32>
    %cst_7 = arith.constant dense<0.000000e+00> : vector<8x192xf32>
    %15 = tpu.matmul %13, %14, %cst_7 {dimension_numbers = #tpu.dot_dimension_numbers<[1], [0], [0], [1], [0, 0, 1, 1], [], []>} : vector<8x64xf32>, vector<64x192xf32>, vector<8x192xf32> -> vector<8x192xf32>
    %c0_8 = arith.constant 0 : index
    %c0_9 = arith.constant 0 : index
    %16 = vector.load %arg8[%c0_8, %c0_9] : memref<64x128xf32, #tpu.memory_space<vmem>>, vector<64x128xf32>
    %cst_10 = arith.constant dense<0.000000e+00> : vector<8x128xf32>
    %17 = tpu.matmul %13, %16, %cst_10 {dimension_numbers = #tpu.dot_dimension_numbers<[1], [0], [0], [1], [0, 0, 1, 1], [], []>} : vector<8x64xf32>, vector<64x128xf32>, vector<8x128xf32> -> vector<8x128xf32>
    %18 = vector.extract_strided_slice %15 {offsets = [0, 0], sizes = [8, 128], strides = [1, 1]} : vector<8x192xf32> to vector<8x128xf32>
    %c0_11 = arith.constant 0 : index
    %c0_12 = arith.constant 0 : index
    %19 = vector.load %arg2[%c0_11, %c0_12] : memref<8x128xf32, #tpu.memory_space<vmem>>, vector<8x128xf32>
    %20 = arith.mulf %18, %19 : vector<8x128xf32>
    %c0_13 = arith.constant 0 : index
    %c0_14 = arith.constant 0 : index
    %21 = vector.load %arg3[%c0_13, %c0_14] : memref<8x128xf32, #tpu.memory_space<vmem>>, vector<8x128xf32>
    %22 = arith.mulf %17, %21 : vector<8x128xf32>
    %23 = arith.addf %20, %22 : vector<8x128xf32>
    %24 = vector.extract_strided_slice %23 {offsets = [0, 0], sizes = [8, 64], strides = [1, 1]} : vector<8x128xf32> to vector<8x64xf32>
    %25 = vector.extract_strided_slice %23 {offsets = [0, 64], sizes = [8, 64], strides = [1, 1]} : vector<8x128xf32> to vector<8x64xf32>
    %26 = vector.extract_strided_slice %15 {offsets = [0, 128], sizes = [8, 64], strides = [1, 1]} : vector<8x192xf32> to vector<8x64xf32>
    %27 = tpu.concatenate %25, %25, %25, %25 in 0 : vector<8x64xf32>, vector<8x64xf32>, vector<8x64xf32>, vector<8x64xf32> -> vector<32x64xf32>
    %c0_15 = arith.constant 0 : index
    %c0_16 = arith.constant 0 : index
    %28 = vector.load %arg9[%c0_15, %c0_16] : memref<32x64xf32, #tpu.memory_space<vmem>>, vector<32x64xf32>
    %29 = arith.mulf %27, %28 : vector<32x64xf32>
    %30 = tpu.concatenate %26, %26, %26, %26 in 0 : vector<8x64xf32>, vector<8x64xf32>, vector<8x64xf32>, vector<8x64xf32> -> vector<32x64xf32>
    %c0_17 = arith.constant 0 : index
    %c0_18 = arith.constant 0 : index
    %31 = vector.load %arg9[%c0_17, %c0_18] : memref<32x64xf32, #tpu.memory_space<vmem>>, vector<32x64xf32>
    %32 = arith.mulf %30, %31 : vector<32x64xf32>
    %cst_19 = arith.constant dense<0.000000e+00> : vector<8x32xf32>
    %33 = tpu.matmul %24, %29, %cst_19 {dimension_numbers = #tpu.dot_dimension_numbers<[1], [1], [0], [0], [0, 0, 1, 0], [], []>} : vector<8x64xf32>, vector<32x64xf32>, vector<8x32xf32> -> vector<8x32xf32>
    %c0_20 = arith.constant 0 : index
    %c0_21 = arith.constant 0 : index
    %34 = vector.load %arg4[%c0_20, %c0_21] : memref<8x32xf32, #tpu.memory_space<vmem>>, vector<8x32xf32>
    %35 = arith.addf %33, %34 : vector<8x32xf32>
    %36 = math.exp %35 : vector<8x32xf32>
    %c0_22 = arith.constant 0 : index
    %c0_23 = arith.constant 0 : index
    %37 = vector.load %arg10[%c0_22, %c0_23] : memref<32x32xf32, #tpu.memory_space<vmem>>, vector<32x32xf32>
    %cst_24 = arith.constant dense<0.000000e+00> : vector<8x32xf32>
    %38 = tpu.matmul %36, %37, %cst_24 {dimension_numbers = #tpu.dot_dimension_numbers<[1], [0], [0], [1], [0, 0, 1, 1], [], []>} : vector<8x32xf32>, vector<32x32xf32>, vector<8x32xf32> -> vector<8x32xf32>
    %cst_25 = arith.constant 1.000000e-30 : f32
    %39 = vector.broadcast %cst_25 : f32 to vector<8x32xf32>
    %40 = arith.maximumf %38, %39 : vector<8x32xf32>
    %41 = tpu.reciprocal %40 : vector<8x32xf32> -> vector<8x32xf32>
    %42 = arith.mulf %36, %41 : vector<8x32xf32>
    %cst_26 = arith.constant dense<0.000000e+00> : vector<8x64xf32>
    %43 = tpu.matmul %42, %32, %cst_26 {dimension_numbers = #tpu.dot_dimension_numbers<[1], [0], [0], [1], [0, 0, 1, 1], [], []>} : vector<8x32xf32>, vector<32x64xf32>, vector<8x64xf32> -> vector<8x64xf32>
    %c0_27 = arith.constant 0 : index
    %c0_28 = arith.constant 0 : index
    %44 = vector.load %arg11[%c0_27, %c0_28] : memref<64x64xf32, #tpu.memory_space<vmem>>, vector<64x64xf32>
    %cst_29 = arith.constant dense<0.000000e+00> : vector<8x64xf32>
    %45 = tpu.matmul %43, %44, %cst_29 {dimension_numbers = #tpu.dot_dimension_numbers<[1], [0], [0], [1], [0, 0, 1, 1], [], []>} : vector<8x64xf32>, vector<64x64xf32>, vector<8x64xf32> -> vector<8x64xf32>
    %46 = arith.addf %0, %45 : vector<8x64xf32>
    %47 = arith.mulf %46, %46 : vector<8x64xf32>
    %cst_30 = arith.constant dense<0.000000e+00> : vector<8xf32>
    %48 = vector.multi_reduction <add>, %47, %cst_30 [1] : vector<8x64xf32> to vector<8xf32>
    %49 = vector.shape_cast %48 : vector<8xf32> to vector<8x1xf32>
    %cst_31 = arith.constant 6.400000e+01 : f32
    %50 = vector.broadcast %cst_31 : f32 to vector<8x1xf32>
    %51 = arith.divf %49, %50 : vector<8x1xf32>
    %cst_32 = arith.constant 9.99999974E-6 : f32
    %52 = vector.broadcast %cst_32 : f32 to vector<8x1xf32>
    %53 = arith.addf %51, %52 : vector<8x1xf32>
    %54 = math.rsqrt %53 : vector<8x1xf32>
    %55 = vector.broadcast %54 : vector<8x1xf32> to vector<8x64xf32>
    %56 = arith.mulf %46, %55 : vector<8x64xf32>
    %c0_33 = arith.constant 0 : index
    %c0_34 = arith.constant 0 : index
    %57 = vector.load %arg6[%c0_33, %c0_34] : memref<1x64xf32, #tpu.memory_space<vmem>>, vector<1x64xf32>
    %58 = vector.broadcast %57 : vector<1x64xf32> to vector<8x64xf32>
    %59 = arith.mulf %56, %58 : vector<8x64xf32>
    %c0_35 = arith.constant 0 : index
    %c0_36 = arith.constant 0 : index
    %60 = vector.load %arg12[%c0_35, %c0_36] : memref<64x256xf32, #tpu.memory_space<vmem>>, vector<64x256xf32>
    %cst_37 = arith.constant dense<0.000000e+00> : vector<8x256xf32>
    %61 = tpu.matmul %59, %60, %cst_37 {dimension_numbers = #tpu.dot_dimension_numbers<[1], [0], [0], [1], [0, 0, 1, 1], [], []>} : vector<8x64xf32>, vector<64x256xf32>, vector<8x256xf32> -> vector<8x256xf32>
    %62 = vector.extract_strided_slice %61 {offsets = [0, 0], sizes = [8, 128], strides = [1, 1]} : vector<8x256xf32> to vector<8x128xf32>
    %63 = vector.extract_strided_slice %61 {offsets = [0, 128], sizes = [8, 128], strides = [1, 1]} : vector<8x256xf32> to vector<8x128xf32>
    %64 = arith.negf %62 : vector<8x128xf32>
    %65 = math.exp %64 : vector<8x128xf32>
    %cst_38 = arith.constant 1.000000e+00 : f32
    %66 = vector.broadcast %cst_38 : f32 to vector<8x128xf32>
    %67 = arith.addf %66, %65 : vector<8x128xf32>
    %68 = arith.divf %66, %67 : vector<8x128xf32>
    %69 = arith.mulf %62, %68 : vector<8x128xf32>
    %70 = arith.mulf %69, %63 : vector<8x128xf32>
    %c0_39 = arith.constant 0 : index
    %c0_40 = arith.constant 0 : index
    %71 = vector.load %arg13[%c0_39, %c0_40] : memref<128x64xf32, #tpu.memory_space<vmem>>, vector<128x64xf32>
    %cst_41 = arith.constant dense<0.000000e+00> : vector<8x64xf32>
    %72 = tpu.matmul %70, %71, %cst_41 {dimension_numbers = #tpu.dot_dimension_numbers<[1], [0], [0], [1], [0, 0, 1, 1], [], []>} : vector<8x128xf32>, vector<128x64xf32>, vector<8x64xf32> -> vector<8x64xf32>
    %73 = arith.addf %46, %72 : vector<8x64xf32>
    %c0_42 = arith.constant 0 : index
    %c0_43 = arith.constant 0 : index
    %74 = vector.load %arg14[%c0_42, %c0_43] : memref<8x64xf32, #tpu.memory_space<vmem>>, vector<8x64xf32>
    tpu.vector_store %arg14[%c0_42, %c0_43], %73 {strides = array<i32>} : memref<8x64xf32, #tpu.memory_space<vmem>>, vector<8x64xf32>,
    return
  }
  func.func @transform_0(%arg0: i32) -> (i32, i32) {
    %c0_i32 = arith.constant 0 : i32
    %c0_i32_0 = arith.constant 0 : i32
    return %arg0, %c0_i32 : i32, i32
  }
  func.func @transform_1(%arg0: i32) -> (i32, i32) {
    %c0_i32 = arith.constant 0 : i32
    %c0_i32_0 = arith.constant 0 : i32
    %c0_i32_1 = arith.constant 0 : i32
    return %c0_i32, %c0_i32_0 : i32, i32
  }
  func.func @transform_2(%arg0: i32) -> (i32, i32) {
    %c0_i32 = arith.constant 0 : i32
    %c0_i32_0 = arith.constant 0 : i32
    %c0_i32_1 = arith.constant 0 : i32
    return %c0_i32, %c0_i32_0 : i32, i32
  }
  func.func @transform_3(%arg0: i32) -> (i32, i32) {
    %c0_i32 = arith.constant 0 : i32
    %c0_i32_0 = arith.constant 0 : i32
    %c0_i32_1 = arith.constant 0 : i32
    return %c0_i32, %c0_i32_0 : i32, i32
  }
  func.func @transform_4(%arg0: i32) -> (i32, i32) {
    %c0_i32 = arith.constant 0 : i32
    %c0_i32_0 = arith.constant 0 : i32
    %c0_i32_1 = arith.constant 0 : i32
    return %c0_i32, %c0_i32_0 : i32, i32
  }
  func.func @transform_5(%arg0: i32) -> (i32, i32) {
    %c0_i32 = arith.constant 0 : i32
    %c0_i32_0 = arith.constant 0 : i32
    %c0_i32_1 = arith.constant 0 : i32
    return %c0_i32, %c0_i32_0 : i32, i32
  }
  func.func @transform_6(%arg0: i32) -> (i32, i32) {
    %c0_i32 = arith.constant 0 : i32
    %c0_i32_0 = arith.constant 0 : i32
    %c0_i32_1 = arith.constant 0 : i32
    return %c0_i32, %c0_i32_0 : i32, i32
  }
  func.func @transform_7(%arg0: i32) -> (i32, i32) {
    %c0_i32 = arith.constant 0 : i32
    %c0_i32_0 = arith.constant 0 : i32
    %c0_i32_1 = arith.constant 0 : i32
    return %c0_i32, %c0_i32_0 : i32, i32
  }
  func.func @transform_8(%arg0: i32) -> (i32, i32) {
    %c0_i32 = arith.constant 0 : i32
    %c0_i32_0 = arith.constant 0 : i32
    %c0_i32_1 = arith.constant 0 : i32
    return %c0_i32, %c0_i32_0 : i32, i32
  }
  func.func @transform_9(%arg0: i32) -> (i32, i32) {
    %c0_i32 = arith.constant 0 : i32
    %c0_i32_0 = arith.constant 0 : i32
    %c0_i32_1 = arith.constant 0 : i32
    return %c0_i32, %c0_i32_0 : i32, i32
  }
  func.func @transform_10(%arg0: i32) -> (i32, i32) {
    %c0_i32 = arith.constant 0 : i32
    %c0_i32_0 = arith.constant 0 : i32
    %c0_i32_1 = arith.constant 0 : i32
    return %c0_i32, %c0_i32_0 : i32, i32
  }
  func.func @transform_11(%arg0: i32) -> (i32, i32) {
    %c0_i32 = arith.constant 0 : i32
    %c0_i32_0 = arith.constant 0 : i32
    %c0_i32_1 = arith.constant 0 : i32
    return %c0_i32, %c0_i32_0 : i32, i32
  }
  func.func @transform_12(%arg0: i32) -> (i32, i32) {
    %c0_i32 = arith.constant 0 : i32
    %c0_i32_0 = arith.constant 0 : i32
    %c0_i32_1 = arith.constant 0 : i32
    return %c0_i32, %c0_i32_0 : i32, i32
  }
  func.func @transform_13(%arg0: i32) -> (i32, i32) {
    %c0_i32 = arith.constant 0 : i32
    %c0_i32_0 = arith.constant 0 : i32
    return %arg0, %c0_i32 : i32, i32
  }
}

</mosaic_0001>

<llo_original>
// kernel: decoder_layer.1
$region0: #{decoder_layer.1}
  #allocation0 [shape = 'u32[]', space=smem, size = 0x4, offset = 0x4, fixed_abs, tag = 'smem constant byte address 0x4 - core index']
  #allocation1 [shape = 'u32[144,128]{1,0:T(1,128)}', space=vmem, size = 0x12000, scoped, tag = 'internal scratch']
  %s0 = inlined_call_operand.hbm [shape: f32[16,64], index: 0, kind: input, shape index: {}]
  %s1 = inlined_call_operand.hbm [shape: f32[8,128], index: 1, kind: input, shape index: {}]
  %s2 = inlined_call_operand.hbm [shape: f32[8,128], index: 2, kind: input, shape index: {}]
  %s3 = inlined_call_operand.hbm [shape: f32[8,32], index: 3, kind: input, shape index: {}]
  %s4 = inlined_call_operand.vmem [shape: f32[1,64], index: 4, kind: input, shape index: {}]
  %s5 = inlined_call_operand.vmem [shape: f32[1,64], index: 5, kind: input, shape index: {}]
  %s6 = inlined_call_operand.vmem [shape: f32[64,192], index: 6, kind: input, shape index: {}]
  %s7 = inlined_call_operand.vmem [shape: f32[64,128], index: 7, kind: input, shape index: {}]
  %s8 = inlined_call_operand.vmem [shape: f32[32,64], index: 8, kind: input, shape index: {}]
  %s9 = inlined_call_operand.hbm [shape: f32[32,32], index: 9, kind: input, shape index: {}]
  %s10 = inlined_call_operand.hbm [shape: f32[64,64], index: 10, kind: input, shape index: {}]
  %s11 = inlined_call_operand.hbm [shape: f32[64,256], index: 11, kind: input, shape index: {}]
  %s12 = inlined_call_operand.vmem [shape: f32[128,64], index: 12, kind: input, shape index: {}]
  %s13 = inlined_call_operand.hbm [shape: f32[16,64], index: 13, kind: output, shape index: {}]
  %s14 = sld [smem:[#allocation0]]
  $region113: #{decoder_layer.1} parent=0
    _
  %s16 = ssub.s32 1, %s14
  %s17 = scalar_select 0, %s16, %s14
  $region1: #{decoder_layer.1} parent=0
    #allocation2 [shape = 'u8[8192]{0}', space=vmem, size = 0x2000, scoped, tag = 'input window, operand 0']
    #allocation3 [shape = 's32[2]{0}', space=sflag, size = 0x8, scoped, tag = 'scoped memory for decoder_layer.1']
    #allocation4 [shape = 's32[2]{0}', space=sflag, size = 0x8, scoped, tag = 'scoped memory for decoder_layer.1']
    #allocation5 [shape = 'u8[4096]{0}', space=vmem, size = 0x1000, scoped, tag = 'input window, operand 1, single buffered']
    #allocation6 [shape = 's32[1]{0}', space=sflag, size = 0x4, scoped, tag = 'scoped memory for decoder_layer.1']
    #allocation7 [shape = 'u8[4096]{0}', space=vmem, size = 0x1000, scoped, tag = 'input window, operand 2, single buffered']
    #allocation8 [shape = 'u8[4096]{0}', space=vmem, size = 0x1000, scoped, tag = 'input window, operand 3, single buffered']
    #allocation9 [shape = 's32[1]{0}', space=sflag, size = 0x4, scoped, tag = 'scoped memory for decoder_layer.1']
    #allocation10 [shape = 'u8[16384]{0}', space=vmem, size = 0x4000, scoped, tag = 'input window, operand 9, single buffered']
    #allocation11 [shape = 'u8[32768]{0}', space=vmem, size = 0x8000, scoped, tag = 'input window, operand 10, single buffered']
    #allocation12 [shape = 's32[1]{0}', space=sflag, size = 0x4, scoped, tag = 'scoped memory for decoder_layer.1']
    #allocation13 [shape = 'u8[65536]{0}', space=vmem, size = 0x10000, scoped, tag = 'input window, operand 11, single buffered']
    #allocation14 [shape = 'u8[8192]{0}', space=vmem, size = 0x2000, scoped, tag = 'output window, operand 0']
    %18 = vsyncpa [#allocation3], 0
    %s19 = scalar_lea.sflag [#allocation3], 1
    %20 = vsyncpa %s19, 0
    %21 = vsyncpa [#allocation6], 0
    %22 = vsyncpa [#allocation9], 0
    %23 = vsyncpa [#allocation12], 0
    %24 = vsyncpa [#allocation4], 0
    %s25 = scalar_lea.sflag [#allocation4], 1
    %26 = vsyncpa %s25, 0
    loop: start=0, step=1, limit=4
    $region2: #{decoder_layer.1} parent=1 // loop_pre_header
      _
    $region3: #{decoder_layer.1} parent=1 // loop_header
      %s28 = sphi 0, %s32
      %p29 = scmp.ge.s32.totalorder %s28, 4
      %s38 = sphi 0, %s40
      %s41 = sphi 0, %s38
      %s42 = sphi 0, %s41
      %s58 = sphi 0, %s42
      %s62 = sphi 0, %s62
      %s64 = sphi 0, %s62
      %s65 = sphi 0, %s64
      %s79 = sphi 0, %s65
      %s83 = sphi 0, %s83
      %s85 = sphi 0, %s83
      %s86 = sphi 0, %s85
      %s100 = sphi 0, %s86
      %s104 = sphi 0, %s104
      %s106 = sphi 0, %s104
      %s107 = sphi 0, %s106
      %s121 = sphi 0, %s107
      %s125 = sphi 0, %s125
      %s127 = sphi 0, %s125
      %s128 = sphi 0, %s127
      %s142 = sphi 0, %s128
      %s146 = sphi 0, %s146
      %s148 = sphi 0, %s146
      %s149 = sphi 0, %s148
      %s163 = sphi 0, %s149
      %s167 = sphi 0, %s167
      %s169 = sphi 0, %s167
      %s170 = sphi 0, %s169
      %s184 = sphi 0, %s170
      %s188 = sphi 0, %s188
      %s190 = sphi 0, %s188
      %s191 = sphi 0, %s190
      %s205 = sphi 0, %s191
      %s209 = sphi 0, %s209
      %s211 = sphi 0, %s209
      %s212 = sphi 0, %s211
      %s226 = sphi 0, %s212
      %s230 = sphi 0, %s230
      %s232 = sphi 0, %s230
      %s233 = sphi 0, %s232
      %s247 = sphi 0, %s233
      %s251 = sphi 0, %s251
      %s253 = sphi 0, %s251
      %s254 = sphi 0, %s253
      %s268 = sphi 0, %s254
      %s272 = sphi 0, %s272
      %s274 = sphi 0, %s272
      %s275 = sphi 0, %s274
      %s289 = sphi 0, %s275
      %s293 = sphi 0, %s293
      %s295 = sphi 0, %s293
      %s296 = sphi 0, %s295
      %s310 = sphi 0, %s296
      %s316 = sphi 0, %s318
      %s319 = sphi 0, %s316
      %s320 = sphi 0, %s319
      %s336 = sphi 0, %s320
    $region4: #{decoder_layer.1} parent=1 // loop_header_branch
      %31 = sbr.rel (%p29) target = $region8
    $region5: #{decoder_layer.1} parent=1 // loop_body
      %s33 = ssub.s32 %s28, 1
      %s34 = ssub.s32 %s28, 2
      %s35 = sadd.s32 %s28, 1
      %s36 = ssub.s32 %s28, %s35
      %p37 = scmp.eq.s32.totalorder %s36, 0
      %s39 = sadd.s32 %s38, 1
      %s40 = scalar_select %p37, %s38, %s39
      %p43 = pneg %p37
      %p44 = scmp.eq.s32.totalorder %s28, 1
      %p45 = por %p43, %p44
      %p46 = scmp.ne.s32.totalorder %s38, %s41
      %p47 = scmp.eq.s32.totalorder %s28, 0
      %p48 = por %p46, %p47
      %p49 = scmp.ne.s32.totalorder %s38, %s41
      %p50 = scmp.eq.s32.totalorder %s33, 1
      %p51 = por %p49, %p50
      %p52 = scmp.ne.s32.totalorder %s41, %s42
      %p53 = scmp.eq.s32.totalorder %s33, 0
      %p54 = por %p52, %p53
      %p55 = scmp.ne.s32.totalorder %s41, %s42
      %p56 = scmp.eq.s32.totalorder %s34, 1
      %p57 = por %p55, %p56
      %p59 = scmp.ne.s32.totalorder %s42, %s58
      %p60 = scmp.eq.s32.totalorder %s34, 0
      %p61 = por %p59, %p60
      %s63 = sadd.s32 %s62, 1
      %p66 = scmp.eq.s32.totalorder %s28, 1
      %p67 = scmp.ne.s32.totalorder %s62, %s64
      %p68 = scmp.eq.s32.totalorder %s28, 0
      %p69 = por %p67, %p68
      %p70 = scmp.ne.s32.totalorder %s62, %s64
      %p71 = scmp.eq.s32.totalorder %s33, 1
      %p72 = por %p70, %p71
      %p73 = scmp.ne.s32.totalorder %s64, %s65
      %p74 = scmp.eq.s32.totalorder %s33, 0
      %p75 = por %p73, %p74
      %p76 = scmp.ne.s32.totalorder %s64, %s65
      %p77 = scmp.eq.s32.totalorder %s34, 1
      %p78 = por %p76, %p77
      %p80 = scmp.ne.s32.totalorder %s65, %s79
      %p81 = scmp.eq.s32.totalorder %s34, 0
      %p82 = por %p80, %p81
      %s84 = sadd.s32 %s83, 1
      %p87 = scmp.eq.s32.totalorder %s28, 1
      %p88 = scmp.ne.s32.totalorder %s83, %s85
      %p89 = scmp.eq.s32.totalorder %s28, 0
      %p90 = por %p88, %p89
      %p91 = scmp.ne.s32.totalorder %s83, %s85
      %p92 = scmp.eq.s32.totalorder %s33, 1
      %p93 = por %p91, %p92
      %p94 = scmp.ne.s32.totalorder %s85, %s86
      %p95 = scmp.eq.s32.totalorder %s33, 0
      %p96 = por %p94, %p95
      %p97 = scmp.ne.s32.totalorder %s85, %s86
      %p98 = scmp.eq.s32.totalorder %s34, 1
      %p99 = por %p97, %p98
      %p101 = scmp.ne.s32.totalorder %s86, %s100
      %p102 = scmp.eq.s32.totalorder %s34, 0
      %p103 = por %p101, %p102
      %s105 = sadd.s32 %s104, 1
      %p108 = scmp.eq.s32.totalorder %s28, 1
      %p109 = scmp.ne.s32.totalorder %s104, %s106
      %p110 = scmp.eq.s32.totalorder %s28, 0
      %p111 = por %p109, %p110
      %p112 = scmp.ne.s32.totalorder %s104, %s106
      %p113 = scmp.eq.s32.totalorder %s33, 1
      %p114 = por %p112, %p113
      %p115 = scmp.ne.s32.totalorder %s106, %s107
      %p116 = scmp.eq.s32.totalorder %s33, 0
      %p117 = por %p115, %p116
      %p118 = scmp.ne.s32.totalorder %s106, %s107
      %p119 = scmp.eq.s32.totalorder %s34, 1
      %p120 = por %p118, %p119
      %p122 = scmp.ne.s32.totalorder %s107, %s121
      %p123 = scmp.eq.s32.totalorder %s34, 0
      %p124 = por %p122, %p123
      %s126 = sadd.s32 %s125, 1
      %p129 = scmp.eq.s32.totalorder %s28, 1
      %p130 = scmp.ne.s32.totalorder %s125, %s127
      %p131 = scmp.eq.s32.totalorder %s28, 0
      %p132 = por %p130, %p131
      %p133 = scmp.ne.s32.totalorder %s125, %s127
      %p134 = scmp.eq.s32.totalorder %s33, 1
      %p135 = por %p133, %p134
      %p136 = scmp.ne.s32.totalorder %s127, %s128
      %p137 = scmp.eq.s32.totalorder %s33, 0
      %p138 = por %p136, %p137
      %p139 = scmp.ne.s32.totalorder %s127, %s128
      %p140 = scmp.eq.s32.totalorder %s34, 1
      %p141 = por %p139, %p140
      %p143 = scmp.ne.s32.totalorder %s128, %s142
      %p144 = scmp.eq.s32.totalorder %s34, 0
      %p145 = por %p143, %p144
      %s147 = sadd.s32 %s146, 1
      %p150 = scmp.eq.s32.totalorder %s28, 1
      %p151 = scmp.ne.s32.totalorder %s146, %s148
      %p152 = scmp.eq.s32.totalorder %s28, 0
      %p153 = por %p151, %p152
      %p154 = scmp.ne.s32.totalorder %s146, %s148
      %p155 = scmp.eq.s32.totalorder %s33, 1
      %p156 = por %p154, %p155
      %p157 = scmp.ne.s32.totalorder %s148, %s149
      %p158 = scmp.eq.s32.totalorder %s33, 0
      %p159 = por %p157, %p158
      %p160 = scmp.ne.s32.totalorder %s148, %s149
      %p161 = scmp.eq.s32.totalorder %s34, 1
      %p162 = por %p160, %p161
      %p164 = scmp.ne.s32.totalorder %s149, %s163
      %p165 = scmp.eq.s32.totalorder %s34, 0
      %p166 = por %p164, %p165
      %s168 = sadd.s32 %s167, 1
      %p171 = scmp.eq.s32.totalorder %s28, 1
      %p172 = scmp.ne.s32.totalorder %s167, %s169
      %p173 = scmp.eq.s32.totalorder %s28, 0
      %p174 = por %p172, %p173
      %p175 = scmp.ne.s32.totalorder %s167, %s169
      %p176 = scmp.eq.s32.totalorder %s33, 1
      %p177 = por %p175, %p176
      %p178 = scmp.ne.s32.totalorder %s169, %s170
      %p179 = scmp.eq.s32.totalorder %s33, 0
      %p180 = por %p178, %p179
      %p181 = scmp.ne.s32.totalorder %s169, %s170
      %p182 = scmp.eq.s32.totalorder %s34, 1
      %p183 = por %p181, %p182
      %p185 = scmp.ne.s32.totalorder %s170, %s184
      %p186 = scmp.eq.s32.totalorder %s34, 0
      %p187 = por %p185, %p186
      %s189 = sadd.s32 %s188, 1
      %p192 = scmp.eq.s32.totalorder %s28, 1
      %p193 = scmp.ne.s32.totalorder %s188, %s190
      %p194 = scmp.eq.s32.totalorder %s28, 0
      %p195 = por %p193, %p194
      %p196 = scmp.ne.s32.totalorder %s188, %s190
      %p197 = scmp.eq.s32.totalorder %s33, 1
      %p198 = por %p196, %p197
      %p199 = scmp.ne.s32.totalorder %s190, %s191
      %p200 = scmp.eq.s32.totalorder %s33, 0
      %p201 = por %p199, %p200
      %p202 = scmp.ne.s32.totalorder %s190, %s191
      %p203 = scmp.eq.s32.totalorder %s34, 1
      %p204 = por %p202, %p203
      %p206 = scmp.ne.s32.totalorder %s191, %s205
      %p207 = scmp.eq.s32.totalorder %s34, 0
      %p208 = por %p206, %p207
      %s210 = sadd.s32 %s209, 1
      %p213 = scmp.eq.s32.totalorder %s28, 1
      %p214 = scmp.ne.s32.totalorder %s209, %s211
      %p215 = scmp.eq.s32.totalorder %s28, 0
      %p216 = por %p214, %p215
      %p217 = scmp.ne.s32.totalorder %s209, %s211
      %p218 = scmp.eq.s32.totalorder %s33, 1
      %p219 = por %p217, %p218
      %p220 = scmp.ne.s32.totalorder %s211, %s212
      %p221 = scmp.eq.s32.totalorder %s33, 0
      %p222 = por %p220, %p221
      %p223 = scmp.ne.s32.totalorder %s211, %s212
      %p224 = scmp.eq.s32.totalorder %s34, 1
      %p225 = por %p223, %p224
      %p227 = scmp.ne.s32.totalorder %s212, %s226
      %p228 = scmp.eq.s32.totalorder %s34, 0
      %p229 = por %p227, %p228
      %s231 = sadd.s32 %s230, 1
      %p234 = scmp.eq.s32.totalorder %s28, 1
      %p235 = scmp.ne.s32.totalorder %s230, %s232
      %p236 = scmp.eq.s32.totalorder %s28, 0
      %p237 = por %p235, %p236
      %p238 = scmp.ne.s32.totalorder %s230, %s232
      %p239 = scmp.eq.s32.totalorder %s33, 1
      %p240 = por %p238, %p239
      %p241 = scmp.ne.s32.totalorder %s232, %s233
      %p242 = scmp.eq.s32.totalorder %s33, 0
      %p243 = por %p241, %p242
      %p244 = scmp.ne.s32.totalorder %s232, %s233
      %p245 = scmp.eq.s32.totalorder %s34, 1
      %p246 = por %p244, %p245
      %p248 = scmp.ne.s32.totalorder %s233, %s247
      %p249 = scmp.eq.s32.totalorder %s34, 0
      %p250 = por %p248, %p249
      %s252 = sadd.s32 %s251, 1
      %p255 = scmp.eq.s32.totalorder %s28, 1
      %p256 = scmp.ne.s32.totalorder %s251, %s253
      %p257 = scmp.eq.s32.totalorder %s28, 0
      %p258 = por %p256, %p257
      %p259 = scmp.ne.s32.totalorder %s251, %s253
      %p260 = scmp.eq.s32.totalorder %s33, 1
      %p261 = por %p259, %p260
      %p262 = scmp.ne.s32.totalorder %s253, %s254
      %p263 = scmp.eq.s32.totalorder %s33, 0
      %p264 = por %p262, %p263
      %p265 = scmp.ne.s32.totalorder %s253, %s254
      %p266 = scmp.eq.s32.totalorder %s34, 1
      %p267 = por %p265, %p266
      %p269 = scmp.ne.s32.totalorder %s254, %s268
      %p270 = scmp.eq.s32.totalorder %s34, 0
      %p271 = por %p269, %p270
      %s273 = sadd.s32 %s272, 1
      %p276 = scmp.eq.s32.totalorder %s28, 1
      %p277 = scmp.ne.s32.totalorder %s272, %s274
      %p278 = scmp.eq.s32.totalorder %s28, 0
      %p279 = por %p277, %p278
      %p280 = scmp.ne.s32.totalorder %s272, %s274
      %p281 = scmp.eq.s32.totalorder %s33, 1
      %p282 = por %p280, %p281
      %p283 = scmp.ne.s32.totalorder %s274, %s275
      %p284 = scmp.eq.s32.totalorder %s33, 0
      %p285 = por %p283, %p284
      %p286 = scmp.ne.s32.totalorder %s274, %s275
      %p287 = scmp.eq.s32.totalorder %s34, 1
      %p288 = por %p286, %p287
      %p290 = scmp.ne.s32.totalorder %s275, %s289
      %p291 = scmp.eq.s32.totalorder %s34, 0
      %p292 = por %p290, %p291
      %s294 = sadd.s32 %s293, 1
      %p297 = scmp.eq.s32.totalorder %s28, 1
      %p298 = scmp.ne.s32.totalorder %s293, %s295
      %p299 = scmp.eq.s32.totalorder %s28, 0
      %p300 = por %p298, %p299
      %p301 = scmp.ne.s32.totalorder %s293, %s295
      %p302 = scmp.eq.s32.totalorder %s33, 1
      %p303 = por %p301, %p302
      %p304 = scmp.ne.s32.totalorder %s295, %s296
      %p305 = scmp.eq.s32.totalorder %s33, 0
      %p306 = por %p304, %p305
      %p307 = scmp.ne.s32.totalorder %s295, %s296
      %p308 = scmp.eq.s32.totalorder %s34, 1
      %p309 = por %p307, %p308
      %p311 = scmp.ne.s32.totalorder %s296, %s310
      %p312 = scmp.eq.s32.totalorder %s34, 0
      %p313 = por %p311, %p312
      %s314 = ssub.s32 %s28, %s35
      %p315 = scmp.eq.s32.totalorder %s314, 0
      %s317 = sadd.s32 %s316, 1
      %s318 = scalar_select %p315, %s316, %s317
      %p321 = pneg %p315
      %p322 = scmp.eq.s32.totalorder %s28, 1
      %p323 = por %p321, %p322
      %p324 = scmp.ne.s32.totalorder %s316, %s319
      %p325 = scmp.eq.s32.totalorder %s28, 0
      %p326 = por %p324, %p325
      %p327 = scmp.ne.s32.totalorder %s316, %s319
      %p328 = scmp.eq.s32.totalorder %s33, 1
      %p329 = por %p327, %p328
      %p330 = scmp.ne.s32.totalorder %s319, %s320
      %p331 = scmp.eq.s32.totalorder %s33, 0
      %p332 = por %p330, %p331
      %p333 = scmp.ne.s32.totalorder %s319, %s320
      %p334 = scmp.eq.s32.totalorder %s34, 1
      %p335 = por %p333, %p334
      %p337 = scmp.ne.s32.totalorder %s320, %s336
      %p338 = scmp.eq.s32.totalorder %s34, 0
      %p339 = por %p337, %p338
      %p340 = scmp.le.s32.totalorder 1, %s28
      %p341 = scmp.lt.s32.totalorder %s28, 3
      %p342 = pnand %p340, %p341
      %p343 = pneg %p342
      // Predicated region
      $region9: #{decoder_layer.1} parent=5 // pred_check
        _
      $region10: #{decoder_layer.1} parent=5 // pred_check_branch
        %345 = sbr.rel (%p342) target = $region12
      $region11: #{decoder_layer.1} parent=5 // pred_region
        %s346 = ssub.s32 %s28, 1
        // Predicated region
        $region13: #{decoder_layer.1} parent=11 // pred_check
          %p347 = pneg %p75
        $region14: #{decoder_layer.1} parent=11 // pred_check_branch
          %349 = sbr.rel (%p347) target = $region16
        $region15: #{decoder_layer.1} parent=11 // pred_region
          %s351 = ssub.s32 128, 128
          %352 = vsyncadd [#allocation6], %s351
          %s354 = sshll.u32 [#allocation5], 4
          %s355 = int_to_ptr.vmem [resolvable:$true] %s354
          %357 = dma.hbm_to_vmem [thread:$0]  %s1, 128, %s355, [#allocation6]
        $region16: #{decoder_layer.1} parent=11 // pred_fallthru
          _
        // Predicated region
        $region17: #{decoder_layer.1} parent=11 // pred_check
          %p358 = pneg %p96
        $region18: #{decoder_layer.1} parent=11 // pred_check_branch
          %360 = sbr.rel (%p358) target = $region20
        $region19: #{decoder_layer.1} parent=11 // pred_region
          %s362 = ssub.s32 128, 128
          %363 = vsyncadd [#allocation6], %s362
          %s365 = sshll.u32 [#allocation7], 4
          %s366 = int_to_ptr.vmem [resolvable:$true] %s365
          %368 = dma.hbm_to_vmem [thread:$0]  %s2, 128, %s366, [#allocation6]
        $region20: #{decoder_layer.1} parent=11 // pred_fallthru
          _
        // Predicated region
        $region21: #{decoder_layer.1} parent=11 // pred_check
          %p369 = pneg %p117
        $region22: #{decoder_layer.1} parent=11 // pred_check_branch
          %371 = sbr.rel (%p369) target = $region24
        $region23: #{decoder_layer.1} parent=11 // pred_region
          %s373 = ssub.s32 128, 128
          %374 = vsyncadd [#allocation9], %s373
          %s376 = sshll.u32 [#allocation8], 4
          %s377 = int_to_ptr.vmem [resolvable:$true] %s376
          %379 = dma.hbm_to_vmem [thread:$0]  %s3, 128, %s377, [#allocation9]
        $region24: #{decoder_layer.1} parent=11 // pred_fallthru
          _
        // Predicated region
        $region25: #{decoder_layer.1} parent=11 // pred_check
          %p380 = pneg %p138
        $region26: #{decoder_layer.1} parent=11 // pred_check_branch
          %382 = sbr.rel (%p380) target = $region28
        $region27: #{decoder_layer.1} parent=11 // pred_region
          _
        $region28: #{decoder_layer.1} parent=11 // pred_fallthru
          _
        // Predicated region
        $region29: #{decoder_layer.1} parent=11 // pred_check
          %p383 = pneg %p159
        $region30: #{decoder_layer.1} parent=11 // pred_check_branch
          %385 = sbr.rel (%p383) target = $region32
        $region31: #{decoder_layer.1} parent=11 // pred_region
          _
        $region32: #{decoder_layer.1} parent=11 // pred_fallthru
          _
        // Predicated region
        $region33: #{decoder_layer.1} parent=11 // pred_check
          %p386 = pneg %p180
        $region34: #{decoder_layer.1} parent=11 // pred_check_branch
          %388 = sbr.rel (%p386) target = $region36
        $region35: #{decoder_layer.1} parent=11 // pred_region
          _
        $region36: #{decoder_layer.1} parent=11 // pred_fallthru
          _
        // Predicated region
        $region37: #{decoder_layer.1} parent=11 // pred_check
          %p389 = pneg %p201
        $region38: #{decoder_layer.1} parent=11 // pred_check_branch
          %391 = sbr.rel (%p389) target = $region40
        $region39: #{decoder_layer.1} parent=11 // pred_region
          _
        $region40: #{decoder_layer.1} parent=11 // pred_fallthru
          _
        // Predicated region
        $region41: #{decoder_layer.1} parent=11 // pred_check
          %p392 = pneg %p222
        $region42: #{decoder_layer.1} parent=11 // pred_check_branch
          %394 = sbr.rel (%p392) target = $region44
        $region43: #{decoder_layer.1} parent=11 // pred_region
          _
        $region44: #{decoder_layer.1} parent=11 // pred_fallthru
          _
        // Predicated region
        $region45: #{decoder_layer.1} parent=11 // pred_check
          %p395 = pneg %p243
        $region46: #{decoder_layer.1} parent=11 // pred_check_branch
          %397 = sbr.rel (%p395) target = $region48
        $region47: #{decoder_layer.1} parent=11 // pred_region
          %s399 = ssub.s32 512, 512
          %400 = vsyncadd [#allocation9], %s399
          %s401 = sshll.u32 [#allocation10], 4
          %s402 = int_to_ptr.vmem [resolvable:$true] %s401
          %407 = dma.hbm_to_vmem [thread:$0]  %s9, 512, %s402, [#allocation9], 128, 128, 8
        $region48: #{decoder_layer.1} parent=11 // pred_fallthru
          _
        // Predicated region
        $region49: #{decoder_layer.1} parent=11 // pred_check
          %p408 = pneg %p264
        $region50: #{decoder_layer.1} parent=11 // pred_check_branch
          %410 = sbr.rel (%p408) target = $region52
        $region51: #{decoder_layer.1} parent=11 // pred_region
          %s412 = ssub.s32 1024, 1024
          %413 = vsyncadd [#allocation12], %s412
          %s414 = sshll.u32 [#allocation11], 4
          %s415 = int_to_ptr.vmem [resolvable:$true] %s414
          %420 = dma.hbm_to_vmem [thread:$0]  %s10, 1024, %s415, [#allocation12], 128, 128, 8
        $region52: #{decoder_layer.1} parent=11 // pred_fallthru
          _
        // Predicated region
        $region53: #{decoder_layer.1} parent=11 // pred_check
          %p421 = pneg %p285
        $region54: #{decoder_layer.1} parent=11 // pred_check_branch
          %423 = sbr.rel (%p421) target = $region56
        $region55: #{decoder_layer.1} parent=11 // pred_region
          %s425 = ssub.s32 2048, 2048
          %426 = vsyncadd [#allocation12], %s425
          %s427 = sshll.u32 [#allocation13], 4
          %s428 = int_to_ptr.vmem [resolvable:$true] %s427
          %433 = dma.hbm_to_vmem [thread:$0]  %s11, 2048, %s428, [#allocation12], 256, 256, 16
        $region56: #{decoder_layer.1} parent=11 // pred_fallthru
          _
        // Predicated region
        $region57: #{decoder_layer.1} parent=11 // pred_check
          %p434 = pneg %p306
        $region58: #{decoder_layer.1} parent=11 // pred_check_branch
          %436 = sbr.rel (%p434) target = $region60
        $region59: #{decoder_layer.1} parent=11 // pred_region
          _
        $region60: #{decoder_layer.1} parent=11 // pred_fallthru
          _
      $region12: #{decoder_layer.1} parent=5 // pred_fallthru
        _
      %p437 = scmp.lt.s32.totalorder %s28, 2
      // Predicated region
      $region61: #{decoder_layer.1} parent=5 // pred_check
        %p438 = pneg %p437
      $region62: #{decoder_layer.1} parent=5 // pred_check_branch
        %440 = sbr.rel (%p438) target = $region64
      $region63: #{decoder_layer.1} parent=5 // pred_region
        // Predicated region
        $region65: #{decoder_layer.1} parent=63 // pred_check
          %p441 = pneg %p48
        $region66: #{decoder_layer.1} parent=63 // pred_check_branch
          %443 = sbr.rel (%p441) target = $region68
        $region67: #{decoder_layer.1} parent=63 // pred_region
          %s444 = sand.u32 %s38, 1
          %s445 = scalar_lea.sflag [#allocation3], %s444
          %s446 = sand.u32 %s38, 1
          %s447 = smul.addr %s446, 8
          %s448 = scalar_lea.vmem [#allocation2], %s447
          %s450 = ssub.s32 128, 128
          %451 = vsyncadd %s445, %s450
          %s452 = smul.addr %s28, 128
          %s453 = scalar_lea.hbm %s0, %s452
          %s455 = sshll.u32 %s448, 4
          %s456 = int_to_ptr.vmem [resolvable:$true] %s455
          %458 = dma.hbm_to_vmem [thread:$0]  %s453, 128, %s456, %s445
        $region68: #{decoder_layer.1} parent=63 // pred_fallthru
          _
      $region64: #{decoder_layer.1} parent=5 // pred_fallthru
        _
      %p459 = scmp.le.s32.totalorder 1, %s28
      %p460 = scmp.lt.s32.totalorder %s28, 3
      %p461 = pnand %p459, %p460
      %p462 = pneg %p461
      // Predicated region
      $region69: #{decoder_layer.1} parent=5 // pred_check
        _
      $region70: #{decoder_layer.1} parent=5 // pred_check_branch
        %464 = sbr.rel (%p461) target = $region72
      $region71: #{decoder_layer.1} parent=5 // pred_region
        %s465 = ssub.s32 %s28, 1
        %s466 = sand.u32 %s41, 1
        %s467 = scalar_lea.sflag [#allocation3], %s466
        %s468 = sand.u32 %s41, 1
        %s469 = smul.addr %s468, 8
        %s470 = scalar_lea.vmem [#allocation2], %s469
        // Predicated region
        $region73: #{decoder_layer.1} parent=71 // pred_check
          %p471 = pneg %p54
        $region74: #{decoder_layer.1} parent=71 // pred_check_branch
          %473 = sbr.rel (%p471) target = $region76
        $region75: #{decoder_layer.1} parent=71 // pred_region
          %474 = dma.done %s467, 128
        $region76: #{decoder_layer.1} parent=71 // pred_fallthru
          _
        // Predicated region
        $region77: #{decoder_layer.1} parent=71 // pred_check
          %p475 = pneg %p75
        $region78: #{decoder_layer.1} parent=71 // pred_check_branch
          %477 = sbr.rel (%p475) target = $region80
        $region79: #{decoder_layer.1} parent=71 // pred_region
          %478 = dma.done [#allocation6], 128
        $region80: #{decoder_layer.1} parent=71 // pred_fallthru
          _
        // Predicated region
        $region81: #{decoder_layer.1} parent=71 // pred_check
          %p479 = pneg %p96
        $region82: #{decoder_layer.1} parent=71 // pred_check_branch
          %481 = sbr.rel (%p479) target = $region84
        $region83: #{decoder_layer.1} parent=71 // pred_region
          %482 = dma.done [#allocation6], 128
        $region84: #{decoder_layer.1} parent=71 // pred_fallthru
          _
        // Predicated region
        $region85: #{decoder_layer.1} parent=71 // pred_check
          %p483 = pneg %p117
        $region86: #{decoder_layer.1} parent=71 // pred_check_branch
          %485 = sbr.rel (%p483) target = $region88
        $region87: #{decoder_layer.1} parent=71 // pred_region
          %486 = dma.done [#allocation9], 128
        $region88: #{decoder_layer.1} parent=71 // pred_fallthru
          _
        // Predicated region
        $region89: #{decoder_layer.1} parent=71 // pred_check
          %p487 = pneg %p243
        $region90: #{decoder_layer.1} parent=71 // pred_check_branch
          %489 = sbr.rel (%p487) target = $region92
        $region91: #{decoder_layer.1} parent=71 // pred_region
          %490 = dma.done [#allocation9], 512
        $region92: #{decoder_layer.1} parent=71 // pred_fallthru
          _
        // Predicated region
        $region93: #{decoder_layer.1} parent=71 // pred_check
          %p491 = pneg %p264
        $region94: #{decoder_layer.1} parent=71 // pred_check_branch
          %493 = sbr.rel (%p491) target = $region96
        $region95: #{decoder_layer.1} parent=71 // pred_region
          %494 = dma.done [#allocation12], 1024
        $region96: #{decoder_layer.1} parent=71 // pred_fallthru
          _
        // Predicated region
        $region97: #{decoder_layer.1} parent=71 // pred_check
          %p495 = pneg %p285
        $region98: #{decoder_layer.1} parent=71 // pred_check_branch
          %497 = sbr.rel (%p495) target = $region100
        $region99: #{decoder_layer.1} parent=71 // pred_region
          %498 = dma.done [#allocation12], 2048
        $region100: #{decoder_layer.1} parent=71 // pred_fallthru
          _
        %s499 = sand.u32 %s41, 1
        %s500 = scalar_lea.sflag [#allocation3], %s499
        %s501 = sand.u32 %s41, 1
        %s502 = smul.addr %s501, 8
        %s503 = scalar_lea.vmem [#allocation2], %s502
        %p504 = pneg %p54
        %p505 = pneg %p51
        %p506 = pneg %p75
        %p507 = pneg %p72
        %p508 = pneg %p96
        %p509 = pneg %p93
        %p510 = pneg %p117
        %p511 = pneg %p114
        %p512 = pneg %p138
        %p513 = pneg %p135
        %p514 = pneg %p159
        %p515 = pneg %p156
        %p516 = pneg %p180
        %p517 = pneg %p177
        %p518 = pneg %p201
        %p519 = pneg %p198
        %p520 = pneg %p222
        %p521 = pneg %p219
        %p522 = pneg %p243
        %p523 = pneg %p240
        %p524 = pneg %p264
        %p525 = pneg %p261
        %p526 = pneg %p285
        %p527 = pneg %p282
        %p528 = pneg %p306
        %p529 = pneg %p303
        %p530 = pneg %p332
        %p531 = pneg %p329
        %s532 = sand.u32 %s319, 1
        %s533 = scalar_lea.sflag [#allocation4], %s532
        %s534 = sand.u32 %s319, 1
        %s535 = smul.addr %s534, 8
        %s536 = scalar_lea.vmem [#allocation14], %s535
        %v537 = vld [vmem:[%s470] sm:$0xff]
        %v538 = vmul.f32 %v537, %v537
        %vm539 = vcmask 523264
        %v540 = vsel %vm539, %v538, 0.0
        %541 = vadd.xlane.f32.xlu0 %v540
        %v542 = vpop.xlane.xlu0 %541
        %v543 = vrcp.pop 64.0
        %v544 = vmul.f32 %v542, %v543
        %v545 = vadd.f32 %v544, 1e-05
        %v546 = vrsqrt.pop %v545
        %v547 = vmul.f32 %v537, %v546
        %v548 = vld [vmem:[%s4] sm:$0x1]
        %v550 = vlaneseq
        %v551 = vshrl.u32 %v550, 7
        %v552 = vsub.s32 0, %v551
        %v553 = vrot.slane %v548, %v552
        %v555 = vmul.f32 %v547, %v553
        %v556 = vld [vmem:[%s6] sm:$0xff]
        %v557 = vld [vmem:[%s6 + $0x8] sm:$0xff]
        %v558 = vld [vmem:[%s6 + $0x10] sm:$0xff]
        %v559 = vld [vmem:[%s6 + $0x18] sm:$0xff]
        %v560 = vld [vmem:[%s6 + $0x20] sm:$0xff]
        %v561 = vld [vmem:[%s6 + $0x28] sm:$0xff]
        %v562 = vld [vmem:[%s6 + $0x30] sm:$0xff]
        %v563 = vld [vmem:[%s6 + $0x38] sm:$0xff]
        %v564 = vld [vmem:[%s6 + $0x40] sm:$0xff]
        %v565 = vld [vmem:[%s6 + $0x48] sm:$0xff]
        %v566 = vld [vmem:[%s6 + $0x50] sm:$0xff]
        %v567 = vld [vmem:[%s6 + $0x58] sm:$0xff]
        %v568 = vld [vmem:[%s6 + $0x60] sm:$0xff]
        %v569 = vld [vmem:[%s6 + $0x68] sm:$0xff]
        %v570 = vld [vmem:[%s6 + $0x70] sm:$0xff]
        %v571 = vld [vmem:[%s6 + $0x78] sm:$0xff]
        %v573 = vsel %vm539, %v555, 0
        %575 = vmatprep.subr.mxu0 %v557
        %576 = vmatpush1.msra.mxu0 %v556
        %577 = vmatprep.subr.mxu0 %v559
        %578 = vmatpush1.msra.mxu0 %v558
        %579 = vmatprep.subr.mxu0 %v561
        %580 = vmatpush1.msra.mxu0 %v560
        %581 = vmatprep.subr.mxu0 %v563
        %582 = vmatpush1.msra.mxu0 %v562
        %583 = vmatprep.subr.mxu0 %v565
        %584 = vmatpush1.msra.mxu0 %v564
        %585 = vmatprep.subr.mxu0 %v567
        %586 = vmatpush1.msra.mxu0 %v566
        %587 = vmatprep.subr.mxu0 %v569
        %588 = vmatpush1.msra.mxu0 %v568
        %589 = vmatprep.subr.mxu0 %v571
        %590 = vmatpush1.msra.mxu0 %v570
        %591 = vmatprep.subr.mxu0 0.0
        %592 = vmatpush1.msra.mxu0 0.0
        %593 = vmatprep.subr.mxu0 0.0
        %594 = vmatpush1.msra.mxu0 0.0
        %595 = vmatprep.subr.mxu0 0.0
        %596 = vmatpush1.msra.mxu0 0.0
        %597 = vmatprep.subr.mxu0 0.0
        %598 = vmatpush1.msra.mxu0 0.0
        %599 = vmatprep.subr.mxu0 0.0
        %600 = vmatpush1.msra.mxu0 0.0
        %601 = vmatprep.subr.mxu0 0.0
        %602 = vmatpush1.msra.mxu0 0.0
        %603 = vmatprep.subr.mxu0 0.0
        %604 = vmatpush1.msra.mxu0 0.0
        %605 = vmatprep.subr.mxu0 0.0
        %606 = vmatpush1.msra.mxu0 0.0
        %607 = vmatprep.subr.mxu0 0.0
        %608 = vmatpush1.msra.mxu0 0.0
        %609 = vmatprep.subr.mxu0 0.0
        %610 = vmatpush1.msra.mxu0 0.0
        %611 = vmatprep.subr.mxu0 0.0
        %612 = vmatpush1.msra.mxu0 0.0
        %613 = vmatprep.subr.mxu0 0.0
        %614 = vmatpush1.msra.mxu0 0.0
        %615 = vmatprep.subr.mxu0 0.0
        %616 = vmatpush1.msra.mxu0 0.0
        %617 = vmatprep.subr.mxu0 0.0
        %618 = vmatpush1.msra.mxu0 0.0
        %619 = vmatprep.subr.mxu0 0.0
        %620 = vmatpush1.msra.mxu0 0.0
        %621 = vmatprep.subr.mxu0 0.0
        %622 = vmatpush1.msra.mxu0 0.0
        %623 = vmatprep.subr.mxu0 0.0
        %624 = vmatpush1.msra.mxu0 0.0
        %625 = vmatprep.subr.mxu0 0.0
        %626 = vmatpush1.msra.mxu0 0.0
        %627 = vmatprep.subr.mxu0 0.0
        %628 = vmatpush1.msra.mxu0 0.0
        %629 = vmatprep.subr.mxu0 0.0
        %630 = vmatpush1.msra.mxu0 0.0
        %631 = vmatprep.subr.mxu0 0.0
        %632 = vmatpush1.msra.mxu0 0.0
        %633 = vmatprep.subr.mxu0 0.0
        %634 = vmatpush1.msra.mxu0 0.0
        %635 = vmatprep.subr.mxu0 0.0
        %636 = vmatpush1.msra.mxu0 0.0
        %637 = vmatprep.subr.mxu0 0.0
        %638 = vmatpush1.msra.mxu0 0.0
        %639 = vmatprep.mubr.f32.mxu0 0.0
        %640 = vmatmul.mubr.f32.gmra.mrb[0].mxu0 %v573
        %v641 = vpop.f32.mrb[0].mxu0
        %v642 = vadd.f32 0.0, %v641
        %v643 = vpop.f32.mrb[0].mxu0
        %v644 = vadd.f32 0.0, %v643
        %645 = vdwg.mxu0
        %v646 = vld [vmem:[%s7] sm:$0xff]
        %v647 = vld [vmem:[%s7 + $0x8] sm:$0xff]
        %v648 = vld [vmem:[%s7 + $0x10] sm:$0xff]
        %v649 = vld [vmem:[%s7 + $0x18] sm:$0xff]
        %v650 = vld [vmem:[%s7 + $0x20] sm:$0xff]
        %v651 = vld [vmem:[%s7 + $0x28] sm:$0xff]
        %v652 = vld [vmem:[%s7 + $0x30] sm:$0xff]
        %v653 = vld [vmem:[%s7 + $0x38] sm:$0xff]
        %654 = vmatprep.subr.mxu0 0.0
        %655 = vmatpush1.msra.mxu0 %v646
        %656 = vmatprep.subr.mxu0 0.0
        %657 = vmatpush1.msra.mxu0 %v647
        %658 = vmatprep.subr.mxu0 0.0
        %659 = vmatpush1.msra.mxu0 %v648
        %660 = vmatprep.subr.mxu0 0.0
        %661 = vmatpush1.msra.mxu0 %v649
        %662 = vmatprep.subr.mxu0 0.0
        %663 = vmatpush1.msra.mxu0 %v650
        %664 = vmatprep.subr.mxu0 0.0
        %665 = vmatpush1.msra.mxu0 %v651
        %666 = vmatprep.subr.mxu0 0.0
        %667 = vmatpush1.msra.mxu0 %v652
        %668 = vmatprep.subr.mxu0 0.0
        %669 = vmatpush1.msra.mxu0 %v653
        %670 = vmatprep.subr.mxu0 0.0
        %671 = vmatpush1.msra.mxu0 0.0
        %672 = vmatprep.subr.mxu0 0.0
        %673 = vmatpush1.msra.mxu0 0.0
        %674 = vmatprep.subr.mxu0 0.0
        %675 = vmatpush1.msra.mxu0 0.0
        %676 = vmatprep.subr.mxu0 0.0
        %677 = vmatpush1.msra.mxu0 0.0
        %678 = vmatprep.subr.mxu0 0.0
        %679 = vmatpush1.msra.mxu0 0.0
        %680 = vmatprep.subr.mxu0 0.0
        %681 = vmatpush1.msra.mxu0 0.0
        %682 = vmatprep.subr.mxu0 0.0
        %683 = vmatpush1.msra.mxu0 0.0
        %684 = vmatprep.subr.mxu0 0.0
        %685 = vmatpush1.msra.mxu0 0.0
        %686 = vmatprep.subr.mxu0 0.0
        %687 = vmatpush1.msra.mxu0 0.0
        %688 = vmatprep.subr.mxu0 0.0
        %689 = vmatpush1.msra.mxu0 0.0
        %690 = vmatprep.subr.mxu0 0.0
        %691 = vmatpush1.msra.mxu0 0.0
        %692 = vmatprep.subr.mxu0 0.0
        %693 = vmatpush1.msra.mxu0 0.0
        %694 = vmatprep.subr.mxu0 0.0
        %695 = vmatpush1.msra.mxu0 0.0
        %696 = vmatprep.subr.mxu0 0.0
        %697 = vmatpush1.msra.mxu0 0.0
        %698 = vmatprep.subr.mxu0 0.0
        %699 = vmatpush1.msra.mxu0 0.0
        %700 = vmatprep.subr.mxu0 0.0
        %701 = vmatpush1.msra.mxu0 0.0
        %702 = vmatprep.subr.mxu0 0.0
        %703 = vmatpush1.msra.mxu0 0.0
        %704 = vmatprep.subr.mxu0 0.0
        %705 = vmatpush1.msra.mxu0 0.0
        %706 = vmatprep.subr.mxu0 0.0
        %707 = vmatpush1.msra.mxu0 0.0
        %708 = vmatprep.subr.mxu0 0.0
        %709 = vmatpush1.msra.mxu0 0.0
        %710 = vmatprep.subr.mxu0 0.0
        %711 = vmatpush1.msra.mxu0 0.0
        %712 = vmatprep.subr.mxu0 0.0
        %713 = vmatpush1.msra.mxu0 0.0
        %714 = vmatprep.subr.mxu0 0.0
        %715 = vmatpush1.msra.mxu0 0.0
        %716 = vmatprep.subr.mxu0 0.0
        %717 = vmatpush1.msra.mxu0 0.0
        %718 = vmatprep.mubr.f32.mxu0 0.0
        %719 = vmatmul.mubr.f32.gmra.mrb[0].mxu0 %v573
        %v720 = vpop.f32.mrb[0].mxu0
        %v721 = vadd.f32 0.0, %v720
        %v722 = vpop.f32.mrb[0].mxu0
        %723 = vdwg.mxu0
        %v724 = vld [vmem:[#allocation5] sm:$0xff]
        %v725 = vmul.f32 %v642, %v724
        %v726 = vld [vmem:[#allocation7] sm:$0xff]
        %v727 = vmul.f32 %v721, %v726
        %v728 = vadd.f32 %v725, %v727
        %v729 = vld [vmem:[%s8] sm:$0xff]
        %v730 = vld [vmem:[%s8 + $0x8] sm:$0xff]
        %v731 = vld [vmem:[%s8 + $0x10] sm:$0xff]
        %v732 = vld [vmem:[%s8 + $0x18] sm:$0xff]
        %737 = vrot.lane.b32.xlu0 %v729, 64
        %v738 = vpop.permute.xlu0 %737
        %739 = vrot.lane.b32.xlu0 %v730, 64
        %v740 = vpop.permute.xlu0 %739
        %741 = vrot.lane.b32.xlu0 %v731, 64
        %v742 = vpop.permute.xlu0 %741
        %743 = vrot.lane.b32.xlu0 %v732, 64
        %v744 = vpop.permute.xlu0 %743
        %v749 = vmul.f32 %v728, %v738
        %v750 = vmul.f32 %v728, %v740
        %v751 = vmul.f32 %v728, %v742
        %v752 = vmul.f32 %v728, %v744
        %v753 = vmul.f32 %v644, %v729
        %v754 = vmul.f32 %v644, %v730
        %v755 = vmul.f32 %v644, %v731
        %v756 = vmul.f32 %v644, %v732
        %v757 = vld [vmem:[#allocation8] sm:$0xff]
        %762 = vrot.lane.b32.xlu0 %v749, 64
        %v763 = vpop.permute.xlu0 %762
        %764 = vrot.lane.b32.xlu0 %v750, 64
        %v765 = vpop.permute.xlu0 %764
        %766 = vrot.lane.b32.xlu0 %v751, 64
        %v767 = vpop.permute.xlu0 %766
        %768 = vrot.lane.b32.xlu0 %v752, 64
        %v769 = vpop.permute.xlu0 %768
        %v771 = vsel %vm539, %v728, 0
        %v773 = vsel %vm539, %v763, 0
        %v775 = vsel %vm539, %v765, 0
        %v777 = vsel %vm539, %v767, 0
        %v779 = vsel %vm539, %v769, 0
        %781 = vmatprep.subr.mxu0 0.0
        %782 = vmatpush1.xpose.msra.mxu0 %v773
        %783 = vmatprep.subr.mxu0 0.0
        %784 = vmatpush1.xpose.msra.mxu0 %v775
        %785 = vmatprep.subr.mxu0 0.0
        %786 = vmatpush1.xpose.msra.mxu0 %v777
        %787 = vmatprep.subr.mxu0 0.0
        %788 = vmatpush1.xpose.msra.mxu0 %v779
        %789 = vmatprep.subr.mxu0 0.0
        %790 = vmatpush1.xpose.msra.mxu0 0.0
        %791 = vmatprep.subr.mxu0 0.0
        %792 = vmatpush1.xpose.msra.mxu0 0.0
        %793 = vmatprep.subr.mxu0 0.0
        %794 = vmatpush1.xpose.msra.mxu0 0.0
        %795 = vmatprep.subr.mxu0 0.0
        %796 = vmatpush1.xpose.msra.mxu0 0.0
        %797 = vmatprep.subr.mxu0 0.0
        %798 = vmatpush1.xpose.msra.mxu0 0.0
        %799 = vmatprep.subr.mxu0 0.0
        %800 = vmatpush1.xpose.msra.mxu0 0.0
        %801 = vmatprep.subr.mxu0 0.0
        %802 = vmatpush1.xpose.msra.mxu0 0.0
        %803 = vmatprep.subr.mxu0 0.0
        %804 = vmatpush1.xpose.msra.mxu0 0.0
        %805 = vmatprep.subr.mxu0 0.0
        %806 = vmatpush1.xpose.msra.mxu0 0.0
        %807 = vmatprep.subr.mxu0 0.0
        %808 = vmatpush1.xpose.msra.mxu0 0.0
        %809 = vmatprep.subr.mxu0 0.0
        %810 = vmatpush1.xpose.msra.mxu0 0.0
        %811 = vmatprep.subr.mxu0 0.0
        %812 = vmatpush1.xpose.msra.mxu0 0.0
        %813 = vmatprep.subr.mxu0 0.0
        %814 = vmatpush1.xpose.msra.mxu0 0.0
        %815 = vmatprep.subr.mxu0 0.0
        %816 = vmatpush1.xpose.msra.mxu0 0.0
        %817 = vmatprep.subr.mxu0 0.0
        %818 = vmatpush1.xpose.msra.mxu0 0.0
        %819 = vmatprep.subr.mxu0 0.0
        %820 = vmatpush1.xpose.msra.mxu0 0.0
        %821 = vmatprep.subr.mxu0 0.0
        %822 = vmatpush1.xpose.msra.mxu0 0.0
        %823 = vmatprep.subr.mxu0 0.0
        %824 = vmatpush1.xpose.msra.mxu0 0.0
        %825 = vmatprep.subr.mxu0 0.0
        %826 = vmatpush1.xpose.msra.mxu0 0.0
        %827 = vmatprep.subr.mxu0 0.0
        %828 = vmatpush1.xpose.msra.mxu0 0.0
        %829 = vmatprep.subr.mxu0 0.0
        %830 = vmatpush1.xpose.msra.mxu0 0.0
        %831 = vmatprep.subr.mxu0 0.0
        %832 = vmatpush1.xpose.msra.mxu0 0.0
        %833 = vmatprep.subr.mxu0 0.0
        %834 = vmatpush1.xpose.msra.mxu0 0.0
        %835 = vmatprep.subr.mxu0 0.0
        %836 = vmatpush1.xpose.msra.mxu0 0.0
        %837 = vmatprep.subr.mxu0 0.0
        %838 = vmatpush1.xpose.msra.mxu0 0.0
        %839 = vmatprep.subr.mxu0 0.0
        %840 = vmatpush1.xpose.msra.mxu0 0.0
        %841 = vmatprep.subr.mxu0 0.0
        %842 = vmatpush1.xpose.msra.mxu0 0.0
        %843 = vmatprep.subr.mxu0 0.0
        %844 = vmatpush1.xpose.msra.mxu0 0.0
        %845 = vmatprep.mubr.f32.mxu0 0.0
        %846 = vmatmul.mubr.f32.gmra.mrb[0].mxu0 %v771
        %v847 = vpop.f32.mrb[0].mxu0
        %v848 = vadd.f32 %v757, %v847
        %v849 = vpop.f32.mrb[0].mxu0
        %850 = vdwg.mxu0
        %v851 = vmul.f32 %v848, 1.442695
        %v852 = vpow.pop %v851
        %v853 = vld [vmem:[#allocation10] sm:$0xff]
        %v854 = vld [vmem:[#allocation10 + $0x8] sm:$0xff]
        %v855 = vld [vmem:[#allocation10 + $0x10] sm:$0xff]
        %v856 = vld [vmem:[#allocation10 + $0x18] sm:$0xff]
        %vm857 = vcmask 261120
        %v859 = vsel %vm857, %v852, 0
        %861 = vmatprep.subr.mxu0 0.0
        %862 = vmatpush1.msra.mxu0 %v853
        %863 = vmatprep.subr.mxu0 0.0
        %864 = vmatpush1.msra.mxu0 %v854
        %865 = vmatprep.subr.mxu0 0.0
        %866 = vmatpush1.msra.mxu0 %v855
        %867 = vmatprep.subr.mxu0 0.0
        %868 = vmatpush1.msra.mxu0 %v856
        %869 = vmatprep.subr.mxu0 0.0
        %870 = vmatpush1.msra.mxu0 0.0
        %871 = vmatprep.subr.mxu0 0.0
        %872 = vmatpush1.msra.mxu0 0.0
        %873 = vmatprep.subr.mxu0 0.0
        %874 = vmatpush1.msra.mxu0 0.0
        %875 = vmatprep.subr.mxu0 0.0
        %876 = vmatpush1.msra.mxu0 0.0
        %877 = vmatprep.subr.mxu0 0.0
        %878 = vmatpush1.msra.mxu0 0.0
        %879 = vmatprep.subr.mxu0 0.0
        %880 = vmatpush1.msra.mxu0 0.0
        %881 = vmatprep.subr.mxu0 0.0
        %882 = vmatpush1.msra.mxu0 0.0
        %883 = vmatprep.subr.mxu0 0.0
        %884 = vmatpush1.msra.mxu0 0.0
        %885 = vmatprep.subr.mxu0 0.0
        %886 = vmatpush1.msra.mxu0 0.0
        %887 = vmatprep.subr.mxu0 0.0
        %888 = vmatpush1.msra.mxu0 0.0
        %889 = vmatprep.subr.mxu0 0.0
        %890 = vmatpush1.msra.mxu0 0.0
        %891 = vmatprep.subr.mxu0 0.0
        %892 = vmatpush1.msra.mxu0 0.0
        %893 = vmatprep.subr.mxu0 0.0
        %894 = vmatpush1.msra.mxu0 0.0
        %895 = vmatprep.subr.mxu0 0.0
        %896 = vmatpush1.msra.mxu0 0.0
        %897 = vmatprep.subr.mxu0 0.0
        %898 = vmatpush1.msra.mxu0 0.0
        %899 = vmatprep.subr.mxu0 0.0
        %900 = vmatpush1.msra.mxu0 0.0
        %901 = vmatprep.subr.mxu0 0.0
        %902 = vmatpush1.msra.mxu0 0.0
        %903 = vmatprep.subr.mxu0 0.0
        %904 = vmatpush1.msra.mxu0 0.0
        %905 = vmatprep.subr.mxu0 0.0
        %906 = vmatpush1.msra.mxu0 0.0
        %907 = vmatprep.subr.mxu0 0.0
        %908 = vmatpush1.msra.mxu0 0.0
        %909 = vmatprep.subr.mxu0 0.0
        %910 = vmatpush1.msra.mxu0 0.0
        %911 = vmatprep.subr.mxu0 0.0
        %912 = vmatpush1.msra.mxu0 0.0
        %913 = vmatprep.subr.mxu0 0.0
        %914 = vmatpush1.msra.mxu0 0.0
        %915 = vmatprep.subr.mxu0 0.0
        %916 = vmatpush1.msra.mxu0 0.0
        %917 = vmatprep.subr.mxu0 0.0
        %918 = vmatpush1.msra.mxu0 0.0
        %919 = vmatprep.subr.mxu0 0.0
        %920 = vmatpush1.msra.mxu0 0.0
        %921 = vmatprep.subr.mxu0 0.0
        %922 = vmatpush1.msra.mxu0 0.0
        %923 = vmatprep.subr.mxu0 0.0
        %924 = vmatpush1.msra.mxu0 0.0
        %925 = vmatprep.mubr.f32.mxu0 0.0
        %926 = vmatmul.mubr.f32.gmra.mrb[0].mxu0 %v859
        %v927 = vpop.f32.mrb[0].mxu0
        %v928 = vadd.f32 0.0, %v927
        %v929 = vpop.f32.mrb[0].mxu0
        %930 = vdwg.mxu0
        %v931 = vmax.f32 %v928, 1e-30
        %v932 = vrcp.pop %v931
        %v933 = vmul.f32 %v852, %v932
        %v935 = vsel %vm857, %v933, 0
        %937 = vmatprep.subr.mxu0 0.0
        %938 = vmatpush1.msra.mxu0 %v753
        %939 = vmatprep.subr.mxu0 0.0
        %940 = vmatpush1.msra.mxu0 %v754
        %941 = vmatprep.subr.mxu0 0.0
        %942 = vmatpush1.msra.mxu0 %v755
        %943 = vmatprep.subr.mxu0 0.0
        %944 = vmatpush1.msra.mxu0 %v756
        %945 = vmatprep.subr.mxu0 0.0
        %946 = vmatpush1.msra.mxu0 0.0
        %947 = vmatprep.subr.mxu0 0.0
        %948 = vmatpush1.msra.mxu0 0.0
        %949 = vmatprep.subr.mxu0 0.0
        %950 = vmatpush1.msra.mxu0 0.0
        %951 = vmatprep.subr.mxu0 0.0
        %952 = vmatpush1.msra.mxu0 0.0
        %953 = vmatprep.subr.mxu0 0.0
        %954 = vmatpush1.msra.mxu0 0.0
        %955 = vmatprep.subr.mxu0 0.0
        %956 = vmatpush1.msra.mxu0 0.0
        %957 = vmatprep.subr.mxu0 0.0
        %958 = vmatpush1.msra.mxu0 0.0
        %959 = vmatprep.subr.mxu0 0.0
        %960 = vmatpush1.msra.mxu0 0.0
        %961 = vmatprep.subr.mxu0 0.0
        %962 = vmatpush1.msra.mxu0 0.0
        %963 = vmatprep.subr.mxu0 0.0
        %964 = vmatpush1.msra.mxu0 0.0
        %965 = vmatprep.subr.mxu0 0.0
        %966 = vmatpush1.msra.mxu0 0.0
        %967 = vmatprep.subr.mxu0 0.0
        %968 = vmatpush1.msra.mxu0 0.0
        %969 = vmatprep.subr.mxu0 0.0
        %970 = vmatpush1.msra.mxu0 0.0
        %971 = vmatprep.subr.mxu0 0.0
        %972 = vmatpush1.msra.mxu0 0.0
        %973 = vmatprep.subr.mxu0 0.0
        %974 = vmatpush1.msra.mxu0 0.0
        %975 = vmatprep.subr.mxu0 0.0
        %976 = vmatpush1.msra.mxu0 0.0
        %977 = vmatprep.subr.mxu0 0.0
        %978 = vmatpush1.msra.mxu0 0.0
        %979 = vmatprep.subr.mxu0 0.0
        %980 = vmatpush1.msra.mxu0 0.0
        %981 = vmatprep.subr.mxu0 0.0
        %982 = vmatpush1.msra.mxu0 0.0
        %983 = vmatprep.subr.mxu0 0.0
        %984 = vmatpush1.msra.mxu0 0.0
        %985 = vmatprep.subr.mxu0 0.0
        %986 = vmatpush1.msra.mxu0 0.0
        %987 = vmatprep.subr.mxu0 0.0
        %988 = vmatpush1.msra.mxu0 0.0
        %989 = vmatprep.subr.mxu0 0.0
        %990 = vmatpush1.msra.mxu0 0.0
        %991 = vmatprep.subr.mxu0 0.0
        %992 = vmatpush1.msra.mxu0 0.0
        %993 = vmatprep.subr.mxu0 0.0
        %994 = vmatpush1.msra.mxu0 0.0
        %995 = vmatprep.subr.mxu0 0.0
        %996 = vmatpush1.msra.mxu0 0.0
        %997 = vmatprep.subr.mxu0 0.0
        %998 = vmatpush1.msra.mxu0 0.0
        %999 = vmatprep.subr.mxu0 0.0
        %1000 = vmatpush1.msra.mxu0 0.0
        %1001 = vmatprep.mubr.f32.mxu0 0.0
        %1002 = vmatmul.mubr.f32.gmra.mrb[0].mxu0 %v935
        %v1003 = vpop.f32.mrb[0].mxu0
        %v1004 = vadd.f32 0.0, %v1003
        %v1005 = vpop.f32.mrb[0].mxu0
        %1006 = vdwg.mxu0
        %v1007 = vld [vmem:[#allocation11] sm:$0xff]
        %v1008 = vld [vmem:[#allocation11 + $0x8] sm:$0xff]
        %v1009 = vld [vmem:[#allocation11 + $0x10] sm:$0xff]
        %v1010 = vld [vmem:[#allocation11 + $0x18] sm:$0xff]
        %v1011 = vld [vmem:[#allocation11 + $0x20] sm:$0xff]
        %v1012 = vld [vmem:[#allocation11 + $0x28] sm:$0xff]
        %v1013 = vld [vmem:[#allocation11 + $0x30] sm:$0xff]
        %v1014 = vld [vmem:[#allocation11 + $0x38] sm:$0xff]
        %v1016 = vsel %vm539, %v1004, 0
        %1018 = vmatprep.subr.mxu0 0.0
        %1019 = vmatpush1.msra.mxu0 %v1007
        %1020 = vmatprep.subr.mxu0 0.0
        %1021 = vmatpush1.msra.mxu0 %v1008
        %1022 = vmatprep.subr.mxu0 0.0
        %1023 = vmatpush1.msra.mxu0 %v1009
        %1024 = vmatprep.subr.mxu0 0.0
        %1025 = vmatpush1.msra.mxu0 %v1010
        %1026 = vmatprep.subr.mxu0 0.0
        %1027 = vmatpush1.msra.mxu0 %v1011
        %1028 = vmatprep.subr.mxu0 0.0
        %1029 = vmatpush1.msra.mxu0 %v1012
        %1030 = vmatprep.subr.mxu0 0.0
        %1031 = vmatpush1.msra.mxu0 %v1013
        %1032 = vmatprep.subr.mxu0 0.0
        %1033 = vmatpush1.msra.mxu0 %v1014
        %1034 = vmatprep.subr.mxu0 0.0
        %1035 = vmatpush1.msra.mxu0 0.0
        %1036 = vmatprep.subr.mxu0 0.0
        %1037 = vmatpush1.msra.mxu0 0.0
        %1038 = vmatprep.subr.mxu0 0.0
        %1039 = vmatpush1.msra.mxu0 0.0
        %1040 = vmatprep.subr.mxu0 0.0
        %1041 = vmatpush1.msra.mxu0 0.0
        %1042 = vmatprep.subr.mxu0 0.0
        %1043 = vmatpush1.msra.mxu0 0.0
        %1044 = vmatprep.subr.mxu0 0.0
        %1045 = vmatpush1.msra.mxu0 0.0
        %1046 = vmatprep.subr.mxu0 0.0
        %1047 = vmatpush1.msra.mxu0 0.0
        %1048 = vmatprep.subr.mxu0 0.0
        %1049 = vmatpush1.msra.mxu0 0.0
        %1050 = vmatprep.subr.mxu0 0.0
        %1051 = vmatpush1.msra.mxu0 0.0
        %1052 = vmatprep.subr.mxu0 0.0
        %1053 = vmatpush1.msra.mxu0 0.0
        %1054 = vmatprep.subr.mxu0 0.0
        %1055 = vmatpush1.msra.mxu0 0.0
        %1056 = vmatprep.subr.mxu0 0.0
        %1057 = vmatpush1.msra.mxu0 0.0
        %1058 = vmatprep.subr.mxu0 0.0
        %1059 = vmatpush1.msra.mxu0 0.0
        %1060 = vmatprep.subr.mxu0 0.0
        %1061 = vmatpush1.msra.mxu0 0.0
        %1062 = vmatprep.subr.mxu0 0.0
        %1063 = vmatpush1.msra.mxu0 0.0
        %1064 = vmatprep.subr.mxu0 0.0
        %1065 = vmatpush1.msra.mxu0 0.0
        %1066 = vmatprep.subr.mxu0 0.0
        %1067 = vmatpush1.msra.mxu0 0.0
        %1068 = vmatprep.subr.mxu0 0.0
        %1069 = vmatpush1.msra.mxu0 0.0
        %1070 = vmatprep.subr.mxu0 0.0
        %1071 = vmatpush1.msra.mxu0 0.0
        %1072 = vmatprep.subr.mxu0 0.0
        %1073 = vmatpush1.msra.mxu0 0.0
        %1074 = vmatprep.subr.mxu0 0.0
        %1075 = vmatpush1.msra.mxu0 0.0
        %1076 = vmatprep.subr.mxu0 0.0
        %1077 = vmatpush1.msra.mxu0 0.0
        %1078 = vmatprep.subr.mxu0 0.0
        %1079 = vmatpush1.msra.mxu0 0.0
        %1080 = vmatprep.subr.mxu0 0.0
        %1081 = vmatpush1.msra.mxu0 0.0
        %1082 = vmatprep.mubr.f32.mxu0 0.0
        %1083 = vmatmul.mubr.f32.gmra.mrb[0].mxu0 %v1016
        %v1084 = vpop.f32.mrb[0].mxu0
        %v1085 = vadd.f32 0.0, %v1084
        %v1086 = vpop.f32.mrb[0].mxu0
        %1087 = vdwg.mxu0
        %v1088 = vadd.f32 %v537, %v1085
        %v1089 = vmul.f32 %v1088, %v1088
        %v1090 = vsel %vm539, %v1089, 0.0
        %1091 = vadd.xlane.f32.xlu0 %v1090
        %v1092 = vpop.xlane.xlu0 %1091
        %v1093 = vmul.f32 %v1092, %v543
        %v1094 = vadd.f32 %v1093, 1e-05
        %v1095 = vrsqrt.pop %v1094
        %v1096 = vmul.f32 %v1088, %v1095
        %v1097 = vld [vmem:[%s5] sm:$0x1]
        %v1099 = vlaneseq
        %v1100 = vshrl.u32 %v1099, 7
        %v1101 = vsub.s32 0, %v1100
        %v1102 = vrot.slane %v1097, %v1101
        %v1104 = vmul.f32 %v1096, %v1102
        %v1105 = vld [vmem:[#allocation13] sm:$0xff]
        %v1106 = vld [vmem:[#allocation13 + $0x8] sm:$0xff]
        %v1107 = vld [vmem:[#allocation13 + $0x10] sm:$0xff]
        %v1108 = vld [vmem:[#allocation13 + $0x18] sm:$0xff]
        %v1109 = vld [vmem:[#allocation13 + $0x20] sm:$0xff]
        %v1110 = vld [vmem:[#allocation13 + $0x28] sm:$0xff]
        %v1111 = vld [vmem:[#allocation13 + $0x30] sm:$0xff]
        %v1112 = vld [vmem:[#allocation13 + $0x38] sm:$0xff]
        %v1113 = vld [vmem:[#allocation13 + $0x40] sm:$0xff]
        %v1114 = vld [vmem:[#allocation13 + $0x48] sm:$0xff]
        %v1115 = vld [vmem:[#allocation13 + $0x50] sm:$0xff]
        %v1116 = vld [vmem:[#allocation13 + $0x58] sm:$0xff]
        %v1117 = vld [vmem:[#allocation13 + $0x60] sm:$0xff]
        %v1118 = vld [vmem:[#allocation13 + $0x68] sm:$0xff]
        %v1119 = vld [vmem:[#allocation13 + $0x70] sm:$0xff]
        %v1120 = vld [vmem:[#allocation13 + $0x78] sm:$0xff]
        %v1122 = vsel %vm539, %v1104, 0
        %1124 = vmatprep.subr.mxu0 %v1106
        %1125 = vmatpush1.msra.mxu0 %v1105
        %1126 = vmatprep.subr.mxu0 %v1108
        %1127 = vmatpush1.msra.mxu0 %v1107
        %1128 = vmatprep.subr.mxu0 %v1110
        %1129 = vmatpush1.msra.mxu0 %v1109
        %1130 = vmatprep.subr.mxu0 %v1112
        %1131 = vmatpush1.msra.mxu0 %v1111
        %1132 = vmatprep.subr.mxu0 %v1114
        %1133 = vmatpush1.msra.mxu0 %v1113
        %1134 = vmatprep.subr.mxu0 %v1116
        %1135 = vmatpush1.msra.mxu0 %v1115
        %1136 = vmatprep.subr.mxu0 %v1118
        %1137 = vmatpush1.msra.mxu0 %v1117
        %1138 = vmatprep.subr.mxu0 %v1120
        %1139 = vmatpush1.msra.mxu0 %v1119
        %1140 = vmatprep.subr.mxu0 0.0
        %1141 = vmatpush1.msra.mxu0 0.0
        %1142 = vmatprep.subr.mxu0 0.0
        %1143 = vmatpush1.msra.mxu0 0.0
        %1144 = vmatprep.subr.mxu0 0.0
        %1145 = vmatpush1.msra.mxu0 0.0
        %1146 = vmatprep.subr.mxu0 0.0
        %1147 = vmatpush1.msra.mxu0 0.0
        %1148 = vmatprep.subr.mxu0 0.0
        %1149 = vmatpush1.msra.mxu0 0.0
        %1150 = vmatprep.subr.mxu0 0.0
        %1151 = vmatpush1.msra.mxu0 0.0
        %1152 = vmatprep.subr.mxu0 0.0
        %1153 = vmatpush1.msra.mxu0 0.0
        %1154 = vmatprep.subr.mxu0 0.0
        %1155 = vmatpush1.msra.mxu0 0.0
        %1156 = vmatprep.subr.mxu0 0.0
        %1157 = vmatpush1.msra.mxu0 0.0
        %1158 = vmatprep.subr.mxu0 0.0
        %1159 = vmatpush1.msra.mxu0 0.0
        %1160 = vmatprep.subr.mxu0 0.0
        %1161 = vmatpush1.msra.mxu0 0.0
        %1162 = vmatprep.subr.mxu0 0.0
        %1163 = vmatpush1.msra.mxu0 0.0
        %1164 = vmatprep.subr.mxu0 0.0
        %1165 = vmatpush1.msra.mxu0 0.0
        %1166 = vmatprep.subr.mxu0 0.0
        %1167 = vmatpush1.msra.mxu0 0.0
        %1168 = vmatprep.subr.mxu0 0.0
        %1169 = vmatpush1.msra.mxu0 0.0
        %1170 = vmatprep.subr.mxu0 0.0
        %1171 = vmatpush1.msra.mxu0 0.0
        %1172 = vmatprep.subr.mxu0 0.0
        %1173 = vmatpush1.msra.mxu0 0.0
        %1174 = vmatprep.subr.mxu0 0.0
        %1175 = vmatpush1.msra.mxu0 0.0
        %1176 = vmatprep.subr.mxu0 0.0
        %1177 = vmatpush1.msra.mxu0 0.0
        %1178 = vmatprep.subr.mxu0 0.0
        %1179 = vmatpush1.msra.mxu0 0.0
        %1180 = vmatprep.subr.mxu0 0.0
        %1181 = vmatpush1.msra.mxu0 0.0
        %1182 = vmatprep.subr.mxu0 0.0
        %1183 = vmatpush1.msra.mxu0 0.0
        %1184 = vmatprep.subr.mxu0 0.0
        %1185 = vmatpush1.msra.mxu0 0.0
        %1186 = vmatprep.subr.mxu0 0.0
        %1187 = vmatpush1.msra.mxu0 0.0
        %1188 = vmatprep.mubr.f32.mxu0 0.0
        %1189 = vmatmul.mubr.f32.gmra.mrb[0].mxu0 %v1122
        %v1190 = vpop.f32.mrb[0].mxu0
        %v1191 = vadd.f32 0.0, %v1190
        %v1192 = vpop.f32.mrb[0].mxu0
        %v1193 = vadd.f32 0.0, %v1192
        %1194 = vdwg.mxu0
        %v1195 = vxor.u32 %v1191, 2147483648
        %v1196 = vmul.f32 %v1195, 1.442695
        %v1197 = vpow.pop %v1196
        %v1198 = vadd.f32 %v1197, 1.0
        %v1199 = vrcp.pop %v1198
        %v1200 = vmul.f32 1.0, %v1199
        %v1201 = vmul.f32 %v1191, %v1200
        %v1202 = vmul.f32 %v1201, %v1193
        %v1203 = vld [vmem:[%s12] sm:$0xff]
        %v1204 = vld [vmem:[%s12 + $0x8] sm:$0xff]
        %v1205 = vld [vmem:[%s12 + $0x10] sm:$0xff]
        %v1206 = vld [vmem:[%s12 + $0x18] sm:$0xff]
        %v1207 = vld [vmem:[%s12 + $0x20] sm:$0xff]
        %v1208 = vld [vmem:[%s12 + $0x28] sm:$0xff]
        %v1209 = vld [vmem:[%s12 + $0x30] sm:$0xff]
        %v1210 = vld [vmem:[%s12 + $0x38] sm:$0xff]
        %v1211 = vld [vmem:[%s12 + $0x40] sm:$0xff]
        %v1212 = vld [vmem:[%s12 + $0x48] sm:$0xff]
        %v1213 = vld [vmem:[%s12 + $0x50] sm:$0xff]
        %v1214 = vld [vmem:[%s12 + $0x58] sm:$0xff]
        %v1215 = vld [vmem:[%s12 + $0x60] sm:$0xff]
        %v1216 = vld [vmem:[%s12 + $0x68] sm:$0xff]
        %v1217 = vld [vmem:[%s12 + $0x70] sm:$0xff]
        %v1218 = vld [vmem:[%s12 + $0x78] sm:$0xff]
        %1219 = vmatprep.subr.mxu0 0.0
        %1220 = vmatpush1.msra.mxu0 %v1203
        %1221 = vmatprep.subr.mxu0 0.0
        %1222 = vmatpush1.msra.mxu0 %v1204
        %1223 = vmatprep.subr.mxu0 0.0
        %1224 = vmatpush1.msra.mxu0 %v1205
        %1225 = vmatprep.subr.mxu0 0.0
        %1226 = vmatpush1.msra.mxu0 %v1206
        %1227 = vmatprep.subr.mxu0 0.0
        %1228 = vmatpush1.msra.mxu0 %v1207
        %1229 = vmatprep.subr.mxu0 0.0
        %1230 = vmatpush1.msra.mxu0 %v1208
        %1231 = vmatprep.subr.mxu0 0.0
        %1232 = vmatpush1.msra.mxu0 %v1209
        %1233 = vmatprep.subr.mxu0 0.0
        %1234 = vmatpush1.msra.mxu0 %v1210
        %1235 = vmatprep.subr.mxu0 0.0
        %1236 = vmatpush1.msra.mxu0 %v1211
        %1237 = vmatprep.subr.mxu0 0.0
        %1238 = vmatpush1.msra.mxu0 %v1212
        %1239 = vmatprep.subr.mxu0 0.0
        %1240 = vmatpush1.msra.mxu0 %v1213
        %1241 = vmatprep.subr.mxu0 0.0
        %1242 = vmatpush1.msra.mxu0 %v1214
        %1243 = vmatprep.subr.mxu0 0.0
        %1244 = vmatpush1.msra.mxu0 %v1215
        %1245 = vmatprep.subr.mxu0 0.0
        %1246 = vmatpush1.msra.mxu0 %v1216
        %1247 = vmatprep.subr.mxu0 0.0
        %1248 = vmatpush1.msra.mxu0 %v1217
        %1249 = vmatprep.subr.mxu0 0.0
        %1250 = vmatpush1.msra.mxu0 %v1218
        %1251 = vmatprep.subr.mxu0 0.0
        %1252 = vmatpush1.msra.mxu0 0.0
        %1253 = vmatprep.subr.mxu0 0.0
        %1254 = vmatpush1.msra.mxu0 0.0
        %1255 = vmatprep.subr.mxu0 0.0
        %1256 = vmatpush1.msra.mxu0 0.0
        %1257 = vmatprep.subr.mxu0 0.0
        %1258 = vmatpush1.msra.mxu0 0.0
        %1259 = vmatprep.subr.mxu0 0.0
        %1260 = vmatpush1.msra.mxu0 0.0
        %1261 = vmatprep.subr.mxu0 0.0
        %1262 = vmatpush1.msra.mxu0 0.0
        %1263 = vmatprep.subr.mxu0 0.0
        %1264 = vmatpush1.msra.mxu0 0.0
        %1265 = vmatprep.subr.mxu0 0.0
        %1266 = vmatpush1.msra.mxu0 0.0
        %1267 = vmatprep.subr.mxu0 0.0
        %1268 = vmatpush1.msra.mxu0 0.0
        %1269 = vmatprep.subr.mxu0 0.0
        %1270 = vmatpush1.msra.mxu0 0.0
        %1271 = vmatprep.subr.mxu0 0.0
        %1272 = vmatpush1.msra.mxu0 0.0
        %1273 = vmatprep.subr.mxu0 0.0
        %1274 = vmatpush1.msra.mxu0 0.0
        %1275 = vmatprep.subr.mxu0 0.0
        %1276 = vmatpush1.msra.mxu0 0.0
        %1277 = vmatprep.subr.mxu0 0.0
        %1278 = vmatpush1.msra.mxu0 0.0
        %1279 = vmatprep.subr.mxu0 0.0
        %1280 = vmatpush1.msra.mxu0 0.0
        %1281 = vmatprep.subr.mxu0 0.0
        %1282 = vmatpush1.msra.mxu0 0.0
        %1283 = vmatprep.mubr.f32.mxu0 0.0
        %1284 = vmatmul.mubr.f32.gmra.mrb[0].mxu0 %v1202
        %v1285 = vpop.f32.mrb[0].mxu0
        %v1286 = vadd.f32 0.0, %v1285
        %v1287 = vpop.f32.mrb[0].mxu0
        %1288 = vdwg.mxu0
        %v1289 = vadd.f32 %v1088, %v1286
        %1290 = vst.msk [vmem:[%s536] sm:$0xff] %vm539, %v1289
        %s1291 = sand.u32 %s319, 1
        %s1292 = scalar_lea.sflag [#allocation4], %s1291
        %s1293 = sand.u32 %s319, 1
        %s1294 = smul.addr %s1293, 8
        %s1295 = scalar_lea.vmem [#allocation14], %s1294
        // Predicated region
        $region101: #{decoder_layer.1} parent=71 // pred_check
          %p1296 = pneg %p329
        $region102: #{decoder_layer.1} parent=71 // pred_check_branch
          %1298 = sbr.rel (%p1296) target = $region104
        $region103: #{decoder_layer.1} parent=71 // pred_region
          %s1300 = ssub.s32 128, 128
          %1301 = vsyncadd %s1292, %s1300
          %s1302 = smul.addr %s33, 128
          %s1303 = scalar_lea.hbm %s13, %s1302
          %s1305 = sshll.u32 %s1295, 4
          %s1306 = int_to_ptr.vmem [resolvable:$true] %s1305
          %1308 = dma.vmem_to_hbm [thread:$0]  %s1306, 128, %s1303, %s1292
        $region104: #{decoder_layer.1} parent=71 // pred_fallthru
          _
      $region72: #{decoder_layer.1} parent=5 // pred_fallthru
        _
      %p1309 = scmp.le.s32.totalorder 2, %s28
      // Predicated region
      $region105: #{decoder_layer.1} parent=5 // pred_check
        %p1310 = pneg %p1309
      $region106: #{decoder_layer.1} parent=5 // pred_check_branch
        %1312 = sbr.rel (%p1310) target = $region108
      $region107: #{decoder_layer.1} parent=5 // pred_region
        %s1313 = ssub.s32 %s28, 2
        // Predicated region
        $region109: #{decoder_layer.1} parent=107 // pred_check
          %p1314 = pneg %p335
        $region110: #{decoder_layer.1} parent=107 // pred_check_branch
          %1316 = sbr.rel (%p1314) target = $region112
        $region111: #{decoder_layer.1} parent=107 // pred_region
          %s1317 = sand.u32 %s320, 1
          %s1318 = scalar_lea.sflag [#allocation4], %s1317
          %s1319 = sand.u32 %s320, 1
          %s1320 = smul.addr %s1319, 8
          %s1321 = scalar_lea.vmem [#allocation14], %s1320
          %1322 = dma.done %s1318, 128
        $region112: #{decoder_layer.1} parent=107 // pred_fallthru
          _
      $region108: #{decoder_layer.1} parent=5 // pred_fallthru
        _
    $region6: #{decoder_layer.1} parent=1 // loop_footer
      %s32 = sadd.s32 1, %s28
    $region7: #{decoder_layer.1} parent=1 // loop_footer_branch
      %27 = sbr.rel target = $region3
    $region8: #{decoder_layer.1} parent=1 // loop_exit
      _
    %1323 = vsyncpa [#allocation3], 1
    %s1324 = scalar_lea.sflag [#allocation3], 1
    %1325 = vsyncpa %s1324, 1
    %1326 = vsyncpa [#allocation6], 1
    %1327 = vsyncpa [#allocation9], 1
    %1328 = vsyncpa [#allocation12], 1
    %1329 = vsyncpa [#allocation4], 1
    %s1330 = scalar_lea.sflag [#allocation4], 1
    %1331 = vsyncpa %s1330, 1

</llo_original>
